<compile_context>
chip_gen: v5e
topology: v5e:2x2
jax: 0.10.0
libtpu: 0.0.40
codegen_flags: <defaults>
</compile_context>

<pallas_src>
import jax
import jax.numpy as jnp
from jax import lax
from jax.experimental import pallas as pl
from jax.experimental.pallas import tpu as pltpu

EMB = 40          # emb_size
K1 = 25           # shallownet Conv2d(1, E, (1, 25))
KH = 6            # shallownet Conv2d(E, E, (6, 1))  (kernel_size_num_channels)
PW, PS = 75, 15   # AvgPool2d((1, 75), stride (1, 15))
BN_EPS = 1e-5


def _patch_embed_kernel(x_ref, wf_ref, bf_ref, pool_ref, w3_ref, b3_ref,
                        out_ref):
    Bt = x_ref.shape[0]
    H, T = x_ref.shape[2], x_ref.shape[3]
    H2 = H - KH + 1
    NT = Bt * T
    T3 = pool_ref.shape[1] // Bt

    wf = wf_ref[...]                   # (E, K1*KH)  conv1*conv2*BN, k-major
    bf = bf_ref[...]                   # (E, 1)      fused conv + BN bias
    pool = pool_ref[...]               # (NT, Bt*T3) block-diag avg-pool matrix
    w3 = w3_ref[...]                   # (E, E)      1x1 projection conv
    b3 = b3_ref[...]                   # (E, 1)

    # Stack the Bt batch elements along the lane axis: xt[h, b*T + t].
    x = x_ref[...][:, 0]                                          # (Bt, H, T)
    xt = jnp.concatenate([x[b] for b in range(Bt)], axis=1)       # (H, NT)

    # H2 is small & static (spatial conv output rows); plain unroll is fine.
    for h2 in range(H2):
        xs = xt[h2:h2 + KH, :]                                    # (KH, NT)
        # im2col via circular lane rotation of the whole batched slab; the
        # wrapped tail columns (t >= T1 inside each batch segment) get zero
        # weight in `pool`, so they never reach the output.
        blocks = [xs]
        for k in range(1, K1):
            blocks.append(jnp.concatenate([xs[:, k:], xs[:, :k]], axis=1))
        patches = jnp.concatenate(blocks, axis=0)                 # (K1*KH, NT)

        # Fused conv1 + conv2 + BatchNorm: one MXU matmul, K=150, N=Bt*T.
        y = jnp.dot(wf, patches, preferred_element_type=jnp.float32) + bf
        # ELU(alpha=1); clamp the exp argument so the unselected branch cannot
        # overflow.  Dropout(0.5) is identity in eval mode.
        y = jnp.where(y > 0.0, y, jnp.exp(jnp.minimum(y, 0.0)) - 1.0)

        # AvgPool2d((1,75),(1,15)) as a matmul, chained into the projection.
        pooled = jnp.dot(y, pool, preferred_element_type=jnp.float32)   # (E, Bt*T3)
        proj = jnp.dot(w3, pooled, preferred_element_type=jnp.float32) + b3

        # Rearrange('b e h w -> b (h w) e') for this h2 row.
        projT = proj.T.astype(out_ref.dtype)                      # (Bt*T3, E)
        for b in range(Bt):
            out_ref[b, h2 * T3:(h2 + 1) * T3, :] = projT[b * T3:(b + 1) * T3, :]


def _prep_kernel_params(p, bt, T, T3):
    """Fold conv1+conv2+BatchNorm into one weight/bias; build pooling matrix."""
    E = EMB
    # Wf[e, k*KH + kh] = sum_c w2[e, c, kh] * w1[c, k]   (k-major to match the
    # im2col block order built in the kernel).
    wf = jnp.einsum("ech,ck->ekh", p["w2"], p["w1"]).reshape(E, K1 * KH)
    b_conv = jnp.einsum("ech,c->e", p["w2"], p["b1"][:, 0]) + p["b2"][:, 0]
    # Eval-mode BatchNorm folded into the weight rows / bias.
    scale = p["gamma"] / jnp.sqrt(p["rvar"] + BN_EPS)             # (E, 1)
    shift = p["beta"] - p["rmean"] * scale                        # (E, 1)
    wf = scale * wf
    bf = (scale[:, 0] * b_conv + shift[:, 0]).reshape(E, 1)
    # Average-pool matrix: one (T -> T3) block per batch element in the tile.
    t = jnp.arange(T)[:, None]
    t3 = jnp.arange(T3)[None, :]
    win = ((t >= t3 * PS) & (t < t3 * PS + PW)).astype(jnp.float32) / PW  # (T, T3)
    pool = jnp.kron(jnp.eye(bt, dtype=jnp.float32), win)          # (bt*T, bt*T3)
    return wf, bf, pool, p["w3"], p["b3"]


def patch_embedding(x, params, *, batch_tile=8):
    """x: (B, 1, H, T) float32 -> (B, H2*T3, EMB) float32."""
    B, C, H, T = x.shape
    assert C == 1
    E = EMB
    T1 = T - K1 + 1
    H2 = H - KH + 1
    T3 = (T1 - PW) // PS + 1
    seq = H2 * T3

    # Largest batch tile <= batch_tile that divides B (keeps the grid valid;
    # with several tiles the "parallel" axis can shard across TensorCores).
    bt = max(d for d in range(1, min(batch_tile, B) + 1) if B % d == 0)
    wf, bf, pool, w3, b3 = _prep_kernel_params(params, bt, T, T3)

    nt = bt * T
    flops = (B // bt) * H2 * (2 * E * (K1 * KH) * nt
                              + 2 * E * nt * (bt * T3)
                              + 2 * E * E * (bt * T3))
    cost = pl.CostEstimate(
        flops=int(flops),
        transcendentals=int((B // bt) * H2 * E * nt),
        bytes_accessed=int(4 * (x.size + B * seq * E + wf.size + bf.size
                                + pool.size + w3.size + b3.size)))

    grid_spec = pltpu.PrefetchScalarGridSpec(
        num_scalar_prefetch=0,
        grid=(B // bt,),
        in_specs=[
            pl.BlockSpec((bt, 1, H, T), lambda i: (i, 0, 0, 0)),   # x tile
            pl.BlockSpec((E, K1 * KH), lambda i: (0, 0)),          # fused W
            pl.BlockSpec((E, 1), lambda i: (0, 0)),                # fused bias
            pl.BlockSpec((bt * T, bt * T3), lambda i: (0, 0)),     # pool matrix
            pl.BlockSpec((E, E), lambda i: (0, 0)),                # w3
            pl.BlockSpec((E, 1), lambda i: (0, 0)),                # b3
        ],
        out_specs=pl.BlockSpec((bt, seq, E), lambda i: (i, 0, 0)),
    )
    return pl.pallas_call(
        _patch_embed_kernel,
        out_shape=jax.ShapeDtypeStruct((B, seq, E), jnp.float32),
        grid_spec=grid_spec,
        cost_estimate=cost,
        compiler_params=pltpu.CompilerParams(
            dimension_semantics=("parallel",)),
    )(x, wf, bf, pool, w3, b3)


def init_params(key, emb=EMB):
    """Deterministic synthetic parameters matching the module's shapes."""
    ks = jax.random.split(key, 10)
    p = {
        "w1": 0.1 * jax.random.normal(ks[0], (emb, K1), jnp.float32),       # (E,1,1,25)
        "b1": 0.1 * jax.random.normal(ks[1], (emb, 1), jnp.float32),
        "w2": 0.1 * jax.random.normal(ks[2], (emb, emb, KH), jnp.float32),  # (E,E,6,1)
        "b2": 0.1 * jax.random.normal(ks[3], (emb, 1), jnp.float32),
        "gamma": 1.0 + 0.1 * jax.random.normal(ks[4], (emb, 1), jnp.float32),
        "beta": 0.1 * jax.random.normal(ks[5], (emb, 1), jnp.float32),
        "rmean": 0.1 * jax.random.normal(ks[6], (emb, 1), jnp.float32),
        "rvar": jnp.abs(1.0 + 0.1 * jax.random.normal(ks[7], (emb, 1), jnp.float32)),
        "w3": 0.1 * jax.random.normal(ks[8], (emb, emb), jnp.float32),      # (E,E,1,1)
        "b3": 0.1 * jax.random.normal(ks[9], (emb, 1), jnp.float32),
    }
    return p


def reference(x, p):
    """Pure-JAX reference of shallownet + projection (eval mode)."""
    dn = ("NCHW", "OIHW", "NCHW")
    E = EMB
    y = lax.conv_general_dilated(
        x, p["w1"].reshape(E, 1, 1, K1), (1, 1), "VALID",
        dimension_numbers=dn) + p["b1"].reshape(1, E, 1, 1)
    y = lax.conv_general_dilated(
        y, p["w2"].reshape(E, E, KH, 1), (1, 1), "VALID",
        dimension_numbers=dn) + p["b2"].reshape(1, E, 1, 1)
    y = ((y - p["rmean"].reshape(1, E, 1, 1))
         / jnp.sqrt(p["rvar"].reshape(1, E, 1, 1) + BN_EPS)
         * p["gamma"].reshape(1, E, 1, 1) + p["beta"].reshape(1, E, 1, 1))
    y = jnp.where(y > 0, y, jnp.exp(y) - 1.0)
    y = lax.reduce_window(y, 0.0, lax.add,
                          (1, 1, 1, PW), (1, 1, 1, PS), "VALID") / PW
    y = lax.conv_general_dilated(
        y, p["w3"].reshape(E, E, 1, 1), (1, 1), "VALID",
        dimension_numbers=dn) + p["b3"].reshape(1, E, 1, 1)
    B, Ech, H2, T3 = y.shape
    return jnp.transpose(y, (0, 2, 3, 1)).reshape(B, H2 * T3, Ech)


if __name__ == "__main__":
    key = jax.random.PRNGKey(0)
    kx, kp = jax.random.split(key)

    # Small but shape-consistent input: batch=4, 1 "image" channel,
    # H=6 electrode rows (>= KH), T=144 time samples (>= K1-1 + PW).
    # batch_tile=2 -> grid of 2 parallel steps, each stacking 2 elements
    # along the matmul lane axis (N = 288).
    B, H, T = 4, 6, 144
    x = jax.random.normal(kx, (B, 1, H, T), jnp.float32)

    params = init_params(kp)
    out = jax.block_until_ready(patch_embedding(x, params, batch_tile=2))

    T1 = T - K1 + 1
    seq = (H - KH + 1) * ((T1 - PW) // PS + 1)
    assert out.shape == (B, seq, EMB), out.shape

    ref = jax.block_until_ready(reference(x, params))
    max_err = float(jnp.max(jnp.abs(out - ref)))
    assert max_err < 2e-3, f"mismatch vs reference: {max_err}"

    print("KERNEL_OK")
</pallas_src>

<mosaic_0001>
module attributes {stable_mosaic.version = 11 : i64} {
  func.func @_patch_embed_kernel(%arg0: i32, %arg1: memref<2x1x6x144xf32, #tpu.memory_space<vmem>>, %arg2: memref<40x150xf32, #tpu.memory_space<vmem>>, %arg3: memref<40x1xf32, #tpu.memory_space<vmem>>, %arg4: memref<288x8xf32, #tpu.memory_space<vmem>>, %arg5: memref<40x40xf32, #tpu.memory_space<vmem>>, %arg6: memref<40x1xf32, #tpu.memory_space<vmem>>, %arg7: memref<2x4x40xf32, #tpu.memory_space<vmem>>) attributes {dimension_semantics = [#tpu.dimension_semantics<parallel>], iteration_bounds = array<i64: 2>, scalar_prefetch = 0 : i64, scratch_operands = 0 : i64, tpu.core_type = #tpu.core_type<tc>, window_params = [{transform_indices = @transform_0, window_bounds = array<i64: 2, 1, 6, 144>}, {pipeline_mode = #tpu.pipeline_mode<synchronous>, transform_indices = @transform_1, window_bounds = array<i64: 40, 150>}, {pipeline_mode = #tpu.pipeline_mode<synchronous>, transform_indices = @transform_2, window_bounds = array<i64: 40, 1>}, {pipeline_mode = #tpu.pipeline_mode<synchronous>, transform_indices = @transform_3, window_bounds = array<i64: 288, 8>}, {pipeline_mode = #tpu.pipeline_mode<synchronous>, transform_indices = @transform_4, window_bounds = array<i64: 40, 40>}, {pipeline_mode = #tpu.pipeline_mode<synchronous>, transform_indices = @transform_5, window_bounds = array<i64: 40, 1>}, {transform_indices = @transform_6, window_bounds = array<i64: 2, 4, 40>}]} {
    %c0 = arith.constant 0 : index
    %c0_0 = arith.constant 0 : index
    %0 = vector.load %arg2[%c0, %c0_0] : memref<40x150xf32, #tpu.memory_space<vmem>>, vector<40x150xf32>
    %c0_1 = arith.constant 0 : index
    %c0_2 = arith.constant 0 : index
    %1 = vector.load %arg3[%c0_1, %c0_2] : memref<40x1xf32, #tpu.memory_space<vmem>>, vector<40x1xf32>
    %c0_3 = arith.constant 0 : index
    %c0_4 = arith.constant 0 : index
    %2 = vector.load %arg4[%c0_3, %c0_4] : memref<288x8xf32, #tpu.memory_space<vmem>>, vector<288x8xf32>
    %c0_5 = arith.constant 0 : index
    %c0_6 = arith.constant 0 : index
    %3 = vector.load %arg5[%c0_5, %c0_6] : memref<40x40xf32, #tpu.memory_space<vmem>>, vector<40x40xf32>
    %c0_7 = arith.constant 0 : index
    %c0_8 = arith.constant 0 : index
    %4 = vector.load %arg6[%c0_7, %c0_8] : memref<40x1xf32, #tpu.memory_space<vmem>>, vector<40x1xf32>
    %c0_9 = arith.constant 0 : index
    %c0_10 = arith.constant 0 : index
    %c0_11 = arith.constant 0 : index
    %c0_12 = arith.constant 0 : index
    %5 = vector.load %arg1[%c0_9, %c0_10, %c0_11, %c0_12] : memref<2x1x6x144xf32, #tpu.memory_space<vmem>>, vector<2x1x6x144xf32>
    %6 = vector.shape_cast %5 : vector<2x1x6x144xf32> to vector<2x6x144xf32>
    %7 = vector.extract_strided_slice %6 {offsets = [0, 0, 0], sizes = [1, 6, 144], strides = [1, 1, 1]} : vector<2x6x144xf32> to vector<1x6x144xf32>
    %8 = vector.shape_cast %7 : vector<1x6x144xf32> to vector<6x144xf32>
    %9 = vector.extract_strided_slice %6 {offsets = [1, 0, 0], sizes = [1, 6, 144], strides = [1, 1, 1]} : vector<2x6x144xf32> to vector<1x6x144xf32>
    %10 = vector.shape_cast %9 : vector<1x6x144xf32> to vector<6x144xf32>
    %11 = tpu.concatenate %8, %10 in 1 : vector<6x144xf32>, vector<6x144xf32> -> vector<6x288xf32>
    %12 = vector.extract_strided_slice %11 {offsets = [0, 1], sizes = [6, 287], strides = [1, 1]} : vector<6x288xf32> to vector<6x287xf32>
    %13 = vector.extract_strided_slice %11 {offsets = [0, 0], sizes = [6, 1], strides = [1, 1]} : vector<6x288xf32> to vector<6x1xf32>
    %14 = tpu.concatenate %12, %13 in 1 : vector<6x287xf32>, vector<6x1xf32> -> vector<6x288xf32>
    %15 = vector.extract_strided_slice %11 {offsets = [0, 2], sizes = [6, 286], strides = [1, 1]} : vector<6x288xf32> to vector<6x286xf32>
    %16 = vector.extract_strided_slice %11 {offsets = [0, 0], sizes = [6, 2], strides = [1, 1]} : vector<6x288xf32> to vector<6x2xf32>
    %17 = tpu.concatenate %15, %16 in 1 : vector<6x286xf32>, vector<6x2xf32> -> vector<6x288xf32>
    %18 = vector.extract_strided_slice %11 {offsets = [0, 3], sizes = [6, 285], strides = [1, 1]} : vector<6x288xf32> to vector<6x285xf32>
    %19 = vector.extract_strided_slice %11 {offsets = [0, 0], sizes = [6, 3], strides = [1, 1]} : vector<6x288xf32> to vector<6x3xf32>
    %20 = tpu.concatenate %18, %19 in 1 : vector<6x285xf32>, vector<6x3xf32> -> vector<6x288xf32>
    %21 = vector.extract_strided_slice %11 {offsets = [0, 4], sizes = [6, 284], strides = [1, 1]} : vector<6x288xf32> to vector<6x284xf32>
    %22 = vector.extract_strided_slice %11 {offsets = [0, 0], sizes = [6, 4], strides = [1, 1]} : vector<6x288xf32> to vector<6x4xf32>
    %23 = tpu.concatenate %21, %22 in 1 : vector<6x284xf32>, vector<6x4xf32> -> vector<6x288xf32>
    %24 = vector.extract_strided_slice %11 {offsets = [0, 5], sizes = [6, 283], strides = [1, 1]} : vector<6x288xf32> to vector<6x283xf32>
    %25 = vector.extract_strided_slice %11 {offsets = [0, 0], sizes = [6, 5], strides = [1, 1]} : vector<6x288xf32> to vector<6x5xf32>
    %26 = tpu.concatenate %24, %25 in 1 : vector<6x283xf32>, vector<6x5xf32> -> vector<6x288xf32>
    %27 = vector.extract_strided_slice %11 {offsets = [0, 6], sizes = [6, 282], strides = [1, 1]} : vector<6x288xf32> to vector<6x282xf32>
    %28 = vector.extract_strided_slice %11 {offsets = [0, 0], sizes = [6, 6], strides = [1, 1]} : vector<6x288xf32> to vector<6x6xf32>
    %29 = tpu.concatenate %27, %28 in 1 : vector<6x282xf32>, vector<6x6xf32> -> vector<6x288xf32>
    %30 = vector.extract_strided_slice %11 {offsets = [0, 7], sizes = [6, 281], strides = [1, 1]} : vector<6x288xf32> to vector<6x281xf32>
    %31 = vector.extract_strided_slice %11 {offsets = [0, 0], sizes = [6, 7], strides = [1, 1]} : vector<6x288xf32> to vector<6x7xf32>
    %32 = tpu.concatenate %30, %31 in 1 : vector<6x281xf32>, vector<6x7xf32> -> vector<6x288xf32>
    %33 = vector.extract_strided_slice %11 {offsets = [0, 8], sizes = [6, 280], strides = [1, 1]} : vector<6x288xf32> to vector<6x280xf32>
    %34 = vector.extract_strided_slice %11 {offsets = [0, 0], sizes = [6, 8], strides = [1, 1]} : vector<6x288xf32> to vector<6x8xf32>
    %35 = tpu.concatenate %33, %34 in 1 : vector<6x280xf32>, vector<6x8xf32> -> vector<6x288xf32>
    %36 = vector.extract_strided_slice %11 {offsets = [0, 9], sizes = [6, 279], strides = [1, 1]} : vector<6x288xf32> to vector<6x279xf32>
    %37 = vector.extract_strided_slice %11 {offsets = [0, 0], sizes = [6, 9], strides = [1, 1]} : vector<6x288xf32> to vector<6x9xf32>
    %38 = tpu.concatenate %36, %37 in 1 : vector<6x279xf32>, vector<6x9xf32> -> vector<6x288xf32>
    %39 = vector.extract_strided_slice %11 {offsets = [0, 10], sizes = [6, 278], strides = [1, 1]} : vector<6x288xf32> to vector<6x278xf32>
    %40 = vector.extract_strided_slice %11 {offsets = [0, 0], sizes = [6, 10], strides = [1, 1]} : vector<6x288xf32> to vector<6x10xf32>
    %41 = tpu.concatenate %39, %40 in 1 : vector<6x278xf32>, vector<6x10xf32> -> vector<6x288xf32>
    %42 = vector.extract_strided_slice %11 {offsets = [0, 11], sizes = [6, 277], strides = [1, 1]} : vector<6x288xf32> to vector<6x277xf32>
    %43 = vector.extract_strided_slice %11 {offsets = [0, 0], sizes = [6, 11], strides = [1, 1]} : vector<6x288xf32> to vector<6x11xf32>
    %44 = tpu.concatenate %42, %43 in 1 : vector<6x277xf32>, vector<6x11xf32> -> vector<6x288xf32>
    %45 = vector.extract_strided_slice %11 {offsets = [0, 12], sizes = [6, 276], strides = [1, 1]} : vector<6x288xf32> to vector<6x276xf32>
    %46 = vector.extract_strided_slice %11 {offsets = [0, 0], sizes = [6, 12], strides = [1, 1]} : vector<6x288xf32> to vector<6x12xf32>
    %47 = tpu.concatenate %45, %46 in 1 : vector<6x276xf32>, vector<6x12xf32> -> vector<6x288xf32>
    %48 = vector.extract_strided_slice %11 {offsets = [0, 13], sizes = [6, 275], strides = [1, 1]} : vector<6x288xf32> to vector<6x275xf32>
    %49 = vector.extract_strided_slice %11 {offsets = [0, 0], sizes = [6, 13], strides = [1, 1]} : vector<6x288xf32> to vector<6x13xf32>
    %50 = tpu.concatenate %48, %49 in 1 : vector<6x275xf32>, vector<6x13xf32> -> vector<6x288xf32>
    %51 = vector.extract_strided_slice %11 {offsets = [0, 14], sizes = [6, 274], strides = [1, 1]} : vector<6x288xf32> to vector<6x274xf32>
    %52 = vector.extract_strided_slice %11 {offsets = [0, 0], sizes = [6, 14], strides = [1, 1]} : vector<6x288xf32> to vector<6x14xf32>
    %53 = tpu.concatenate %51, %52 in 1 : vector<6x274xf32>, vector<6x14xf32> -> vector<6x288xf32>
    %54 = vector.extract_strided_slice %11 {offsets = [0, 15], sizes = [6, 273], strides = [1, 1]} : vector<6x288xf32> to vector<6x273xf32>
    %55 = vector.extract_strided_slice %11 {offsets = [0, 0], sizes = [6, 15], strides = [1, 1]} : vector<6x288xf32> to vector<6x15xf32>
    %56 = tpu.concatenate %54, %55 in 1 : vector<6x273xf32>, vector<6x15xf32> -> vector<6x288xf32>
    %57 = vector.extract_strided_slice %11 {offsets = [0, 16], sizes = [6, 272], strides = [1, 1]} : vector<6x288xf32> to vector<6x272xf32>
    %58 = vector.extract_strided_slice %11 {offsets = [0, 0], sizes = [6, 16], strides = [1, 1]} : vector<6x288xf32> to vector<6x16xf32>
    %59 = tpu.concatenate %57, %58 in 1 : vector<6x272xf32>, vector<6x16xf32> -> vector<6x288xf32>
    %60 = vector.extract_strided_slice %11 {offsets = [0, 17], sizes = [6, 271], strides = [1, 1]} : vector<6x288xf32> to vector<6x271xf32>
    %61 = vector.extract_strided_slice %11 {offsets = [0, 0], sizes = [6, 17], strides = [1, 1]} : vector<6x288xf32> to vector<6x17xf32>
    %62 = tpu.concatenate %60, %61 in 1 : vector<6x271xf32>, vector<6x17xf32> -> vector<6x288xf32>
    %63 = vector.extract_strided_slice %11 {offsets = [0, 18], sizes = [6, 270], strides = [1, 1]} : vector<6x288xf32> to vector<6x270xf32>
    %64 = vector.extract_strided_slice %11 {offsets = [0, 0], sizes = [6, 18], strides = [1, 1]} : vector<6x288xf32> to vector<6x18xf32>
    %65 = tpu.concatenate %63, %64 in 1 : vector<6x270xf32>, vector<6x18xf32> -> vector<6x288xf32>
    %66 = vector.extract_strided_slice %11 {offsets = [0, 19], sizes = [6, 269], strides = [1, 1]} : vector<6x288xf32> to vector<6x269xf32>
    %67 = vector.extract_strided_slice %11 {offsets = [0, 0], sizes = [6, 19], strides = [1, 1]} : vector<6x288xf32> to vector<6x19xf32>
    %68 = tpu.concatenate %66, %67 in 1 : vector<6x269xf32>, vector<6x19xf32> -> vector<6x288xf32>
    %69 = vector.extract_strided_slice %11 {offsets = [0, 20], sizes = [6, 268], strides = [1, 1]} : vector<6x288xf32> to vector<6x268xf32>
    %70 = vector.extract_strided_slice %11 {offsets = [0, 0], sizes = [6, 20], strides = [1, 1]} : vector<6x288xf32> to vector<6x20xf32>
    %71 = tpu.concatenate %69, %70 in 1 : vector<6x268xf32>, vector<6x20xf32> -> vector<6x288xf32>
    %72 = vector.extract_strided_slice %11 {offsets = [0, 21], sizes = [6, 267], strides = [1, 1]} : vector<6x288xf32> to vector<6x267xf32>
    %73 = vector.extract_strided_slice %11 {offsets = [0, 0], sizes = [6, 21], strides = [1, 1]} : vector<6x288xf32> to vector<6x21xf32>
    %74 = tpu.concatenate %72, %73 in 1 : vector<6x267xf32>, vector<6x21xf32> -> vector<6x288xf32>
    %75 = vector.extract_strided_slice %11 {offsets = [0, 22], sizes = [6, 266], strides = [1, 1]} : vector<6x288xf32> to vector<6x266xf32>
    %76 = vector.extract_strided_slice %11 {offsets = [0, 0], sizes = [6, 22], strides = [1, 1]} : vector<6x288xf32> to vector<6x22xf32>
    %77 = tpu.concatenate %75, %76 in 1 : vector<6x266xf32>, vector<6x22xf32> -> vector<6x288xf32>
    %78 = vector.extract_strided_slice %11 {offsets = [0, 23], sizes = [6, 265], strides = [1, 1]} : vector<6x288xf32> to vector<6x265xf32>
    %79 = vector.extract_strided_slice %11 {offsets = [0, 0], sizes = [6, 23], strides = [1, 1]} : vector<6x288xf32> to vector<6x23xf32>
    %80 = tpu.concatenate %78, %79 in 1 : vector<6x265xf32>, vector<6x23xf32> -> vector<6x288xf32>
    %81 = vector.extract_strided_slice %11 {offsets = [0, 24], sizes = [6, 264], strides = [1, 1]} : vector<6x288xf32> to vector<6x264xf32>
    %82 = vector.extract_strided_slice %11 {offsets = [0, 0], sizes = [6, 24], strides = [1, 1]} : vector<6x288xf32> to vector<6x24xf32>
    %83 = tpu.concatenate %81, %82 in 1 : vector<6x264xf32>, vector<6x24xf32> -> vector<6x288xf32>
    %84 = tpu.concatenate %11, %14, %17, %20, %23, %26, %29, %32, %35, %38, %41, %44, %47, %50, %53, %56 in 0 : vector<6x288xf32>, vector<6x288xf32>, vector<6x288xf32>, vector<6x288xf32>, vector<6x288xf32>, vector<6x288xf32>, vector<6x288xf32>, vector<6x288xf32>, vector<6x288xf32>, vector<6x288xf32>, vector<6x288xf32>, vector<6x288xf32>, vector<6x288xf32>, vector<6x288xf32>, vector<6x288xf32>, vector<6x288xf32> -> vector<96x288xf32>
    %85 = tpu.concatenate %59, %62, %65, %68, %71, %74, %77, %80, %83 in 0 : vector<6x288xf32>, vector<6x288xf32>, vector<6x288xf32>, vector<6x288xf32>, vector<6x288xf32>, vector<6x288xf32>, vector<6x288xf32>, vector<6x288xf32>, vector<6x288xf32> -> vector<54x288xf32>
    %86 = tpu.concatenate %84, %85 in 0 : vector<96x288xf32>, vector<54x288xf32> -> vector<150x288xf32>
    %cst = arith.constant dense<0.000000e+00> : vector<40x288xf32>
    %87 = tpu.matmul %0, %86, %cst {dimension_numbers = #tpu.dot_dimension_numbers<[1], [0], [0], [1], [0, 0, 1, 1], [], []>} : vector<40x150xf32>, vector<150x288xf32>, vector<40x288xf32> -> vector<40x288xf32>
    %88 = vector.broadcast %1 : vector<40x1xf32> to vector<40x288xf32>
    %89 = arith.addf %87, %88 : vector<40x288xf32>
    %cst_13 = arith.constant 0.000000e+00 : f32
    %90 = vector.broadcast %cst_13 : f32 to vector<40x288xf32>
    %91 = arith.cmpf ogt, %89, %90 : vector<40x288xf32>
    %cst_14 = arith.constant 0.000000e+00 : f32
    %92 = vector.broadcast %cst_14 : f32 to vector<40x288xf32>
    %93 = arith.minimumf %89, %92 : vector<40x288xf32>
    %94 = math.exp %93 : vector<40x288xf32>
    %cst_15 = arith.constant 1.000000e+00 : f32
    %95 = vector.broadcast %cst_15 : f32 to vector<40x288xf32>
    %96 = arith.subf %94, %95 : vector<40x288xf32>
    %97 = arith.select %91, %89, %96 : vector<40x288xi1>, vector<40x288xf32>
    %cst_16 = arith.constant dense<0.000000e+00> : vector<40x8xf32>
    %98 = tpu.matmul %97, %2, %cst_16 {dimension_numbers = #tpu.dot_dimension_numbers<[1], [0], [0], [1], [0, 0, 1, 1], [], []>} : vector<40x288xf32>, vector<288x8xf32>, vector<40x8xf32> -> vector<40x8xf32>
    %cst_17 = arith.constant dense<0.000000e+00> : vector<40x8xf32>
    %99 = tpu.matmul %3, %98, %cst_17 {dimension_numbers = #tpu.dot_dimension_numbers<[1], [0], [0], [1], [0, 0, 1, 1], [], []>} : vector<40x40xf32>, vector<40x8xf32>, vector<40x8xf32> -> vector<40x8xf32>
    %100 = vector.broadcast %4 : vector<40x1xf32> to vector<40x8xf32>
    %101 = arith.addf %99, %100 : vector<40x8xf32>
    %102 = tpu.transpose %101, [1, 0] : vector<40x8xf32> -> vector<8x40xf32>
    %103 = vector.extract_strided_slice %102 {offsets = [0, 0], sizes = [4, 40], strides = [1, 1]} : vector<8x40xf32> to vector<4x40xf32>
    %c0_18 = arith.constant 0 : index
    %c0_19 = arith.constant 0 : index
    %c0_20 = arith.constant 0 : index
    %104 = vector.load %arg7[%c0_18, %c0_19, %c0_20] : memref<2x4x40xf32, #tpu.memory_space<vmem>>, vector<1x4x40xf32>
    %105 = vector.shape_cast %104 : vector<1x4x40xf32> to vector<4x40xf32>
    %106 = vector.shape_cast %103 : vector<4x40xf32> to vector<1x4x40xf32>
    tpu.vector_store %arg7[%c0_18, %c0_19, %c0_20], %106 {strides = array<i32>} : memref<2x4x40xf32, #tpu.memory_space<vmem>>, vector<1x4x40xf32>,
    %107 = vector.extract_strided_slice %102 {offsets = [4, 0], sizes = [4, 40], strides = [1, 1]} : vector<8x40xf32> to vector<4x40xf32>
    %c1 = arith.constant 1 : index
    %c0_21 = arith.constant 0 : index
    %c0_22 = arith.constant 0 : index
    %108 = vector.load %arg7[%c1, %c0_21, %c0_22] : memref<2x4x40xf32, #tpu.memory_space<vmem>>, vector<1x4x40xf32>
    %109 = vector.shape_cast %108 : vector<1x4x40xf32> to vector<4x40xf32>
    %110 = vector.shape_cast %107 : vector<4x40xf32> to vector<1x4x40xf32>
    tpu.vector_store %arg7[%c1, %c0_21, %c0_22], %110 {strides = array<i32>} : memref<2x4x40xf32, #tpu.memory_space<vmem>>, vector<1x4x40xf32>,
    return
  }
  func.func @transform_0(%arg0: i32) -> (i32, i32, i32, i32) {
    %c0_i32 = arith.constant 0 : i32
    %c0_i32_0 = arith.constant 0 : i32
    %c0_i32_1 = arith.constant 0 : i32
    %c0_i32_2 = arith.constant 0 : i32
    return %arg0, %c0_i32, %c0_i32_0, %c0_i32_1 : i32, i32, i32, i32
  }
  func.func @transform_1(%arg0: i32) -> (i32, i32) {
    %c0_i32 = arith.constant 0 : i32
    %c0_i32_0 = arith.constant 0 : i32
    %c0_i32_1 = arith.constant 0 : i32
    return %c0_i32, %c0_i32_0 : i32, i32
  }
  func.func @transform_2(%arg0: i32) -> (i32, i32) {
    %c0_i32 = arith.constant 0 : i32
    %c0_i32_0 = arith.constant 0 : i32
    %c0_i32_1 = arith.constant 0 : i32
    return %c0_i32, %c0_i32_0 : i32, i32
  }
  func.func @transform_3(%arg0: i32) -> (i32, i32) {
    %c0_i32 = arith.constant 0 : i32
    %c0_i32_0 = arith.constant 0 : i32
    %c0_i32_1 = arith.constant 0 : i32
    return %c0_i32, %c0_i32_0 : i32, i32
  }
  func.func @transform_4(%arg0: i32) -> (i32, i32) {
    %c0_i32 = arith.constant 0 : i32
    %c0_i32_0 = arith.constant 0 : i32
    %c0_i32_1 = arith.constant 0 : i32
    return %c0_i32, %c0_i32_0 : i32, i32
  }
  func.func @transform_5(%arg0: i32) -> (i32, i32) {
    %c0_i32 = arith.constant 0 : i32
    %c0_i32_0 = arith.constant 0 : i32
    %c0_i32_1 = arith.constant 0 : i32
    return %c0_i32, %c0_i32_0 : i32, i32
  }
  func.func @transform_6(%arg0: i32) -> (i32, i32, i32) {
    %c0_i32 = arith.constant 0 : i32
    %c0_i32_0 = arith.constant 0 : i32
    %c0_i32_1 = arith.constant 0 : i32
    return %arg0, %c0_i32, %c0_i32_0 : i32, i32, i32
  }
}

</mosaic_0001>

<llo_original>
// kernel: tpu_custom_call.1
$region0: #{tpu_custom_call.1}
  #allocation0 [shape = 'u32[]', space=smem, size = 0x4, offset = 0x4, fixed_abs, tag = 'smem constant byte address 0x4 - core index']
  #allocation1 [shape = 'u32[72,128]{1,0:T(1,128)}', space=vmem, size = 0x9000, scoped, tag = 'internal scratch']
  %s0 = inlined_call_operand.vmem [shape: f32[4,1,6,144], index: 0, kind: input, shape index: {}]
  %s1 = inlined_call_operand.vmem [shape: f32[40,150], index: 1, kind: input, shape index: {}]
  %s2 = inlined_call_operand.vmem [shape: f32[40,1], index: 2, kind: input, shape index: {}]
  %s3 = inlined_call_operand.vmem [shape: f32[288,8], index: 3, kind: input, shape index: {}]
  %s4 = inlined_call_operand.vmem [shape: f32[40,40], index: 4, kind: input, shape index: {}]
  %s5 = inlined_call_operand.vmem [shape: f32[40,1], index: 5, kind: input, shape index: {}]
  %s6 = inlined_call_operand.hbm [shape: f32[4,4,40], index: 6, kind: output, shape index: {}]
  %s7 = sld [smem:[#allocation0]]
  $region57: #{tpu_custom_call.1} parent=0
    _
  %s9 = ssub.s32 1, %s7
  %s10 = scalar_select 0, %s9, %s7
  $region1: #{tpu_custom_call.1} parent=0
    #allocation2 [shape = 'u8[8192]{0}', space=vmem, size = 0x2000, scoped, tag = 'output window, operand 0']
    #allocation3 [shape = 's32[2]{0}', space=sflag, size = 0x8, scoped, tag = 'scoped memory for tpu_custom_call.1']
    %11 = vsyncpa [#allocation3], 0
    %s12 = scalar_lea.sflag [#allocation3], 1
    %13 = vsyncpa %s12, 0
    loop: start=0, step=1, limit=4
    $region2: #{tpu_custom_call.1} parent=1 // loop_pre_header
      _
    $region3: #{tpu_custom_call.1} parent=1 // loop_header
      %s15 = sphi 0, %s19
      %p16 = scmp.ge.s32.totalorder %s15, 4
      %s25 = sphi 0, %s27
      %s28 = sphi 0, %s25
      %s29 = sphi 0, %s28
      %s45 = sphi 0, %s29
      %s49 = sphi 0, %s49
      %s51 = sphi 0, %s49
      %s52 = sphi 0, %s51
      %s66 = sphi 0, %s52
      %s70 = sphi 0, %s70
      %s72 = sphi 0, %s70
      %s73 = sphi 0, %s72
      %s87 = sphi 0, %s73
      %s91 = sphi 0, %s91
      %s93 = sphi 0, %s91
      %s94 = sphi 0, %s93
      %s108 = sphi 0, %s94
      %s112 = sphi 0, %s112
      %s114 = sphi 0, %s112
      %s115 = sphi 0, %s114
      %s129 = sphi 0, %s115
      %s133 = sphi 0, %s133
      %s135 = sphi 0, %s133
      %s136 = sphi 0, %s135
      %s150 = sphi 0, %s136
      %s156 = sphi 0, %s158
      %s159 = sphi 0, %s156
      %s160 = sphi 0, %s159
      %s176 = sphi 0, %s160
    $region4: #{tpu_custom_call.1} parent=1 // loop_header_branch
      %18 = sbr.rel (%p16) target = $region8
    $region5: #{tpu_custom_call.1} parent=1 // loop_body
      %s20 = ssub.s32 %s15, 1
      %s21 = ssub.s32 %s15, 2
      %s22 = sadd.s32 %s15, 1
      %s23 = ssub.s32 %s15, %s22
      %p24 = scmp.eq.s32.totalorder %s23, 0
      %s26 = sadd.s32 %s25, 1
      %s27 = scalar_select %p24, %s25, %s26
      %p30 = pneg %p24
      %p31 = scmp.eq.s32.totalorder %s15, 1
      %p32 = por %p30, %p31
      %p33 = scmp.ne.s32.totalorder %s25, %s28
      %p34 = scmp.eq.s32.totalorder %s15, 0
      %p35 = por %p33, %p34
      %p36 = scmp.ne.s32.totalorder %s25, %s28
      %p37 = scmp.eq.s32.totalorder %s20, 1
      %p38 = por %p36, %p37
      %p39 = scmp.ne.s32.totalorder %s28, %s29
      %p40 = scmp.eq.s32.totalorder %s20, 0
      %p41 = por %p39, %p40
      %p42 = scmp.ne.s32.totalorder %s28, %s29
      %p43 = scmp.eq.s32.totalorder %s21, 1
      %p44 = por %p42, %p43
      %p46 = scmp.ne.s32.totalorder %s29, %s45
      %p47 = scmp.eq.s32.totalorder %s21, 0
      %p48 = por %p46, %p47
      %s50 = sadd.s32 %s49, 1
      %p53 = scmp.eq.s32.totalorder %s15, 1
      %p54 = scmp.ne.s32.totalorder %s49, %s51
      %p55 = scmp.eq.s32.totalorder %s15, 0
      %p56 = por %p54, %p55
      %p57 = scmp.ne.s32.totalorder %s49, %s51
      %p58 = scmp.eq.s32.totalorder %s20, 1
      %p59 = por %p57, %p58
      %p60 = scmp.ne.s32.totalorder %s51, %s52
      %p61 = scmp.eq.s32.totalorder %s20, 0
      %p62 = por %p60, %p61
      %p63 = scmp.ne.s32.totalorder %s51, %s52
      %p64 = scmp.eq.s32.totalorder %s21, 1
      %p65 = por %p63, %p64
      %p67 = scmp.ne.s32.totalorder %s52, %s66
      %p68 = scmp.eq.s32.totalorder %s21, 0
      %p69 = por %p67, %p68
      %s71 = sadd.s32 %s70, 1
      %p74 = scmp.eq.s32.totalorder %s15, 1
      %p75 = scmp.ne.s32.totalorder %s70, %s72
      %p76 = scmp.eq.s32.totalorder %s15, 0
      %p77 = por %p75, %p76
      %p78 = scmp.ne.s32.totalorder %s70, %s72
      %p79 = scmp.eq.s32.totalorder %s20, 1
      %p80 = por %p78, %p79
      %p81 = scmp.ne.s32.totalorder %s72, %s73
      %p82 = scmp.eq.s32.totalorder %s20, 0
      %p83 = por %p81, %p82
      %p84 = scmp.ne.s32.totalorder %s72, %s73
      %p85 = scmp.eq.s32.totalorder %s21, 1
      %p86 = por %p84, %p85
      %p88 = scmp.ne.s32.totalorder %s73, %s87
      %p89 = scmp.eq.s32.totalorder %s21, 0
      %p90 = por %p88, %p89
      %s92 = sadd.s32 %s91, 1
      %p95 = scmp.eq.s32.totalorder %s15, 1
      %p96 = scmp.ne.s32.totalorder %s91, %s93
      %p97 = scmp.eq.s32.totalorder %s15, 0
      %p98 = por %p96, %p97
      %p99 = scmp.ne.s32.totalorder %s91, %s93
      %p100 = scmp.eq.s32.totalorder %s20, 1
      %p101 = por %p99, %p100
      %p102 = scmp.ne.s32.totalorder %s93, %s94
      %p103 = scmp.eq.s32.totalorder %s20, 0
      %p104 = por %p102, %p103
      %p105 = scmp.ne.s32.totalorder %s93, %s94
      %p106 = scmp.eq.s32.totalorder %s21, 1
      %p107 = por %p105, %p106
      %p109 = scmp.ne.s32.totalorder %s94, %s108
      %p110 = scmp.eq.s32.totalorder %s21, 0
      %p111 = por %p109, %p110
      %s113 = sadd.s32 %s112, 1
      %p116 = scmp.eq.s32.totalorder %s15, 1
      %p117 = scmp.ne.s32.totalorder %s112, %s114
      %p118 = scmp.eq.s32.totalorder %s15, 0
      %p119 = por %p117, %p118
      %p120 = scmp.ne.s32.totalorder %s112, %s114
      %p121 = scmp.eq.s32.totalorder %s20, 1
      %p122 = por %p120, %p121
      %p123 = scmp.ne.s32.totalorder %s114, %s115
      %p124 = scmp.eq.s32.totalorder %s20, 0
      %p125 = por %p123, %p124
      %p126 = scmp.ne.s32.totalorder %s114, %s115
      %p127 = scmp.eq.s32.totalorder %s21, 1
      %p128 = por %p126, %p127
      %p130 = scmp.ne.s32.totalorder %s115, %s129
      %p131 = scmp.eq.s32.totalorder %s21, 0
      %p132 = por %p130, %p131
      %s134 = sadd.s32 %s133, 1
      %p137 = scmp.eq.s32.totalorder %s15, 1
      %p138 = scmp.ne.s32.totalorder %s133, %s135
      %p139 = scmp.eq.s32.totalorder %s15, 0
      %p140 = por %p138, %p139
      %p141 = scmp.ne.s32.totalorder %s133, %s135
      %p142 = scmp.eq.s32.totalorder %s20, 1
      %p143 = por %p141, %p142
      %p144 = scmp.ne.s32.totalorder %s135, %s136
      %p145 = scmp.eq.s32.totalorder %s20, 0
      %p146 = por %p144, %p145
      %p147 = scmp.ne.s32.totalorder %s135, %s136
      %p148 = scmp.eq.s32.totalorder %s21, 1
      %p149 = por %p147, %p148
      %p151 = scmp.ne.s32.totalorder %s136, %s150
      %p152 = scmp.eq.s32.totalorder %s21, 0
      %p153 = por %p151, %p152
      %s154 = ssub.s32 %s15, %s22
      %p155 = scmp.eq.s32.totalorder %s154, 0
      %s157 = sadd.s32 %s156, 1
      %s158 = scalar_select %p155, %s156, %s157
      %p161 = pneg %p155
      %p162 = scmp.eq.s32.totalorder %s15, 1
      %p163 = por %p161, %p162
      %p164 = scmp.ne.s32.totalorder %s156, %s159
      %p165 = scmp.eq.s32.totalorder %s15, 0
      %p166 = por %p164, %p165
      %p167 = scmp.ne.s32.totalorder %s156, %s159
      %p168 = scmp.eq.s32.totalorder %s20, 1
      %p169 = por %p167, %p168
      %p170 = scmp.ne.s32.totalorder %s159, %s160
      %p171 = scmp.eq.s32.totalorder %s20, 0
      %p172 = por %p170, %p171
      %p173 = scmp.ne.s32.totalorder %s159, %s160
      %p174 = scmp.eq.s32.totalorder %s21, 1
      %p175 = por %p173, %p174
      %p177 = scmp.ne.s32.totalorder %s160, %s176
      %p178 = scmp.eq.s32.totalorder %s21, 0
      %p179 = por %p177, %p178
      %p180 = scmp.le.s32.totalorder 1, %s15
      %p181 = scmp.lt.s32.totalorder %s15, 3
      %p182 = pnand %p180, %p181
      %p183 = pneg %p182
      // Predicated region
      $region9: #{tpu_custom_call.1} parent=5 // pred_check
        _
      $region10: #{tpu_custom_call.1} parent=5 // pred_check_branch
        %185 = sbr.rel (%p182) target = $region12
      $region11: #{tpu_custom_call.1} parent=5 // pred_region
        %s186 = ssub.s32 %s15, 1
        // Predicated region
        $region13: #{tpu_custom_call.1} parent=11 // pred_check
          %p187 = pneg %p62
        $region14: #{tpu_custom_call.1} parent=11 // pred_check_branch
          %189 = sbr.rel (%p187) target = $region16
        $region15: #{tpu_custom_call.1} parent=11 // pred_region
          _
        $region16: #{tpu_custom_call.1} parent=11 // pred_fallthru
          _
        // Predicated region
        $region17: #{tpu_custom_call.1} parent=11 // pred_check
          %p190 = pneg %p83
        $region18: #{tpu_custom_call.1} parent=11 // pred_check_branch
          %192 = sbr.rel (%p190) target = $region20
        $region19: #{tpu_custom_call.1} parent=11 // pred_region
          _
        $region20: #{tpu_custom_call.1} parent=11 // pred_fallthru
          _
        // Predicated region
        $region21: #{tpu_custom_call.1} parent=11 // pred_check
          %p193 = pneg %p104
        $region22: #{tpu_custom_call.1} parent=11 // pred_check_branch
          %195 = sbr.rel (%p193) target = $region24
        $region23: #{tpu_custom_call.1} parent=11 // pred_region
          _
        $region24: #{tpu_custom_call.1} parent=11 // pred_fallthru
          _
        // Predicated region
        $region25: #{tpu_custom_call.1} parent=11 // pred_check
          %p196 = pneg %p125
        $region26: #{tpu_custom_call.1} parent=11 // pred_check_branch
          %198 = sbr.rel (%p196) target = $region28
        $region27: #{tpu_custom_call.1} parent=11 // pred_region
          _
        $region28: #{tpu_custom_call.1} parent=11 // pred_fallthru
          _
        // Predicated region
        $region29: #{tpu_custom_call.1} parent=11 // pred_check
          %p199 = pneg %p146
        $region30: #{tpu_custom_call.1} parent=11 // pred_check_branch
          %201 = sbr.rel (%p199) target = $region32
        $region31: #{tpu_custom_call.1} parent=11 // pred_region
          _
        $region32: #{tpu_custom_call.1} parent=11 // pred_fallthru
          _
      $region12: #{tpu_custom_call.1} parent=5 // pred_fallthru
        _
      %p202 = scmp.lt.s32.totalorder %s15, 2
      // Predicated region
      $region33: #{tpu_custom_call.1} parent=5 // pred_check
        %p203 = pneg %p202
      $region34: #{tpu_custom_call.1} parent=5 // pred_check_branch
        %205 = sbr.rel (%p203) target = $region36
      $region35: #{tpu_custom_call.1} parent=5 // pred_region
        // Predicated region
        $region37: #{tpu_custom_call.1} parent=35 // pred_check
          %p206 = pneg %p35
        $region38: #{tpu_custom_call.1} parent=35 // pred_check_branch
          %208 = sbr.rel (%p206) target = $region40
        $region39: #{tpu_custom_call.1} parent=35 // pred_region
          %s209 = smul.u32 2, %s15
          %p210 = scmp.lt.s32.totalorder %s209, 3
          %s211 = scalar_select %p210, %s209, 3
          %s212 = smul.addr %s211, 2
          %s213 = smul.addr %s212, 8
          %s214 = scalar_lea.vmem %s0, %s213
          %s215 = smul.u32 2, %s15
        $region40: #{tpu_custom_call.1} parent=35 // pred_fallthru
          _
      $region36: #{tpu_custom_call.1} parent=5 // pred_fallthru
        _
      %p216 = scmp.le.s32.totalorder 1, %s15
      %p217 = scmp.lt.s32.totalorder %s15, 3
      %p218 = pnand %p216, %p217
      %p219 = pneg %p218
      // Predicated region
      $region41: #{tpu_custom_call.1} parent=5 // pred_check
        _
      $region42: #{tpu_custom_call.1} parent=5 // pred_check_branch
        %221 = sbr.rel (%p218) target = $region44
      $region43: #{tpu_custom_call.1} parent=5 // pred_region
        %s222 = ssub.s32 %s15, 1
        %s223 = smul.u32 2, %s20
        %p224 = scmp.lt.s32.totalorder %s223, 3
        %s225 = scalar_select %p224, %s223, 3
        %s226 = smul.addr %s225, 2
        %s227 = smul.addr %s226, 8
        %s228 = scalar_lea.vmem %s0, %s227
        %p229 = pneg %p41
        %p230 = pneg %p38
        %p231 = pneg %p62
        %p232 = pneg %p59
        %p233 = pneg %p83
        %p234 = pneg %p80
        %p235 = pneg %p104
        %p236 = pneg %p101
        %p237 = pneg %p125
        %p238 = pneg %p122
        %p239 = pneg %p146
        %p240 = pneg %p143
        %p241 = pneg %p172
        %p242 = pneg %p169
        %s243 = sand.u32 %s159, 1
        %s244 = scalar_lea.sflag [#allocation3], %s243
        %s245 = sand.u32 %s159, 1
        %s246 = smul.addr %s245, 8
        %s247 = scalar_lea.vmem [#allocation2], %s246
        %s248 = smul.u32 2, %s20
        %p249 = scmp.lt.s32.totalorder %s248, 3
        %s250 = scalar_select %p249, %s248, 3
        %s251 = smul.addr %s250, 2
        %s252 = smul.addr %s251, 8
        %s253 = scalar_lea.vmem %s0, %s252
        %s254 = smul.u32 2, %s20
        %s255 = smul.u32 2, %s20
        %v256 = vld [vmem:[%s1] sm:$0xff]
        %v257 = vld [vmem:[%s1 + $0x8] sm:$0xff]
        %v258 = vld [vmem:[%s1 + $0x10] sm:$0xff]
        %v259 = vld [vmem:[%s1 + $0x18] sm:$0xff]
        %v260 = vld [vmem:[%s1 + $0x20] sm:$0xff]
        %v261 = vld [vmem:[%s1 + $0x28] sm:$0xff]
        %v262 = vld [vmem:[%s1 + $0x30] sm:$0xff]
        %v263 = vld [vmem:[%s1 + $0x38] sm:$0xff]
        %v264 = vld [vmem:[%s1 + $0x40] sm:$0xff]
        %v265 = vld [vmem:[%s1 + $0x48] sm:$0xff]
        %v266 = vld [vmem:[%s2] sm:$0xff]
        %v267 = vld [vmem:[%s2 + $0x8] sm:$0xff]
        %v268 = vld [vmem:[%s2 + $0x10] sm:$0xff]
        %v269 = vld [vmem:[%s2 + $0x18] sm:$0xff]
        %v270 = vld [vmem:[%s2 + $0x20] sm:$0xff]
        %v271 = vld [vmem:[%s3] sm:$0xff]
        %v272 = vld [vmem:[%s3 + $0x8] sm:$0xff]
        %v273 = vld [vmem:[%s3 + $0x10] sm:$0xff]
        %v274 = vld [vmem:[%s3 + $0x18] sm:$0xff]
        %v275 = vld [vmem:[%s3 + $0x20] sm:$0xff]
        %v276 = vld [vmem:[%s3 + $0x28] sm:$0xff]
        %v277 = vld [vmem:[%s3 + $0x30] sm:$0xff]
        %v278 = vld [vmem:[%s3 + $0x38] sm:$0xff]
        %v279 = vld [vmem:[%s3 + $0x40] sm:$0xff]
        %v280 = vld [vmem:[%s3 + $0x48] sm:$0xff]
        %v281 = vld [vmem:[%s3 + $0x50] sm:$0xff]
        %v282 = vld [vmem:[%s3 + $0x58] sm:$0xff]
        %v283 = vld [vmem:[%s3 + $0x60] sm:$0xff]
        %v284 = vld [vmem:[%s3 + $0x68] sm:$0xff]
        %v285 = vld [vmem:[%s3 + $0x70] sm:$0xff]
        %v286 = vld [vmem:[%s3 + $0x78] sm:$0xff]
        %v287 = vld [vmem:[%s3 + $0x80] sm:$0xff]
        %v288 = vld [vmem:[%s3 + $0x88] sm:$0xff]
        %v289 = vld [vmem:[%s3 + $0x90] sm:$0xff]
        %v290 = vld [vmem:[%s3 + $0x98] sm:$0xff]
        %v291 = vld [vmem:[%s3 + $0xa0] sm:$0xff]
        %v292 = vld [vmem:[%s3 + $0xa8] sm:$0xff]
        %v293 = vld [vmem:[%s3 + $0xb0] sm:$0xff]
        %v294 = vld [vmem:[%s3 + $0xb8] sm:$0xff]
        %v295 = vld [vmem:[%s3 + $0xc0] sm:$0xff]
        %v296 = vld [vmem:[%s3 + $0xc8] sm:$0xff]
        %v297 = vld [vmem:[%s3 + $0xd0] sm:$0xff]
        %v298 = vld [vmem:[%s3 + $0xd8] sm:$0xff]
        %v299 = vld [vmem:[%s3 + $0xe0] sm:$0xff]
        %v300 = vld [vmem:[%s3 + $0xe8] sm:$0xff]
        %v301 = vld [vmem:[%s3 + $0xf0] sm:$0xff]
        %v302 = vld [vmem:[%s3 + $0xf8] sm:$0xff]
        %v303 = vld [vmem:[%s3 + $0x100] sm:$0xff]
        %v304 = vld [vmem:[%s3 + $0x108] sm:$0xff]
        %v305 = vld [vmem:[%s3 + $0x110] sm:$0xff]
        %v306 = vld [vmem:[%s3 + $0x118] sm:$0xff]
        %v307 = vld [vmem:[%s4] sm:$0xff]
        %v308 = vld [vmem:[%s4 + $0x8] sm:$0xff]
        %v309 = vld [vmem:[%s4 + $0x10] sm:$0xff]
        %v310 = vld [vmem:[%s4 + $0x18] sm:$0xff]
        %v311 = vld [vmem:[%s4 + $0x20] sm:$0xff]
        %v312 = vld [vmem:[%s5] sm:$0xff]
        %v313 = vld [vmem:[%s5 + $0x8] sm:$0xff]
        %v314 = vld [vmem:[%s5 + $0x10] sm:$0xff]
        %v315 = vld [vmem:[%s5 + $0x18] sm:$0xff]
        %v316 = vld [vmem:[%s5 + $0x20] sm:$0xff]
        %v317 = vld [vmem:[%s253] sm:$0x3f]
        %v318 = vld [vmem:[%s253 + $0x8] sm:$0x3f]
        %v319 = vld [vmem:[%s253 + $0x10] sm:$0x3f]
        %v320 = vld [vmem:[%s253 + $0x18] sm:$0x3f]
        %323 = vrot.lane.b32.xlu0 %v319, 16
        %v324 = vpop.permute.xlu0 %323
        %325 = vrot.lane.b32.xlu0 %v320, 16
        %v326 = vpop.permute.xlu0 %325
        %vm327 = vcmask 130048
        %v328 = vsel %vm327, %v324, %v326
        %v331 = vsel %vm327, %v318, %v324
        %334 = vrot.lane.b32.xlu0 %v317, 127
        %v335 = vpop.permute.xlu0 %334
        %336 = vrot.lane.b32.xlu0 %v331, 127
        %v337 = vpop.permute.xlu0 %336
        %338 = vrot.lane.b32.xlu0 %v328, 127
        %v339 = vpop.permute.xlu0 %338
        %vm340 = vcmask 1039360
        %v341 = vsel %vm340, %v335, %v337
        %v342 = vsel %vm340, %v337, %v339
        %344 = vrot.lane.b32.xlu0 %v317, 31
        %v345 = vpop.permute.xlu0 %344
        %vm347 = vcmask 252928
        %v348 = vsel %vm347, %v339, %v345
        %349 = vrot.lane.b32.xlu0 %v317, 126
        %v350 = vpop.permute.xlu0 %349
        %351 = vrot.lane.b32.xlu0 %v331, 126
        %v352 = vpop.permute.xlu0 %351
        %353 = vrot.lane.b32.xlu0 %v328, 126
        %v354 = vpop.permute.xlu0 %353
        %vm355 = vcmask 1031168
        %v356 = vsel %vm355, %v350, %v352
        %v357 = vsel %vm355, %v352, %v354
        %359 = vrot.lane.b32.xlu0 %v317, 30
        %v360 = vpop.permute.xlu0 %359
        %vm362 = vcmask 244736
        %v363 = vsel %vm362, %v354, %v360
        %364 = vrot.lane.b32.xlu0 %v317, 125
        %v365 = vpop.permute.xlu0 %364
        %366 = vrot.lane.b32.xlu0 %v331, 125
        %v367 = vpop.permute.xlu0 %366
        %368 = vrot.lane.b32.xlu0 %v328, 125
        %v369 = vpop.permute.xlu0 %368
        %vm370 = vcmask 1022976
        %v371 = vsel %vm370, %v365, %v367
        %v372 = vsel %vm370, %v367, %v369
        %374 = vrot.lane.b32.xlu0 %v317, 29
        %v375 = vpop.permute.xlu0 %374
        %vm377 = vcmask 236544
        %v378 = vsel %vm377, %v369, %v375
        %379 = vrot.lane.b32.xlu0 %v317, 124
        %v380 = vpop.permute.xlu0 %379
        %381 = vrot.lane.b32.xlu0 %v331, 124
        %v382 = vpop.permute.xlu0 %381
        %383 = vrot.lane.b32.xlu0 %v328, 124
        %v384 = vpop.permute.xlu0 %383
        %vm385 = vcmask 1014784
        %v386 = vsel %vm385, %v380, %v382
        %v387 = vsel %vm385, %v382, %v384
        %391 = vrot.lane.b32.xlu0 %v317, 28
        %v392 = vpop.permute.xlu0 %391
        %vm394 = vcmask 228352
        %v395 = vsel %vm394, %v384, %v392
        %396 = vrot.lane.b32.xlu0 %v317, 123
        %v397 = vpop.permute.xlu0 %396
        %398 = vrot.lane.b32.xlu0 %v331, 123
        %v399 = vpop.permute.xlu0 %398
        %400 = vrot.lane.b32.xlu0 %v328, 123
        %v401 = vpop.permute.xlu0 %400
        %vm402 = vcmask 1006592
        %v403 = vsel %vm402, %v397, %v399
        %v404 = vsel %vm402, %v399, %v401
        %406 = vrot.lane.b32.xlu0 %v317, 27
        %v407 = vpop.permute.xlu0 %406
        %vm409 = vcmask 220160
        %v410 = vsel %vm409, %v401, %v407
        %411 = vrot.lane.b32.xlu0 %v317, 122
        %v412 = vpop.permute.xlu0 %411
        %413 = vrot.lane.b32.xlu0 %v331, 122
        %v414 = vpop.permute.xlu0 %413
        %415 = vrot.lane.b32.xlu0 %v328, 122
        %v416 = vpop.permute.xlu0 %415
        %vm417 = vcmask 998400
        %v418 = vsel %vm417, %v412, %v414
        %v419 = vsel %vm417, %v414, %v416
        %421 = vrot.lane.b32.xlu0 %v317, 26
        %v422 = vpop.permute.xlu0 %421
        %vm424 = vcmask 211968
        %v425 = vsel %vm424, %v416, %v422
        %426 = vrot.lane.b32.xlu0 %v317, 121
        %v427 = vpop.permute.xlu0 %426
        %428 = vrot.lane.b32.xlu0 %v331, 121
        %v429 = vpop.permute.xlu0 %428
        %430 = vrot.lane.b32.xlu0 %v328, 121
        %v431 = vpop.permute.xlu0 %430
        %vm432 = vcmask 990208
        %v433 = vsel %vm432, %v427, %v429
        %v434 = vsel %vm432, %v429, %v431
        %436 = vrot.lane.b32.xlu0 %v317, 25
        %v437 = vpop.permute.xlu0 %436
        %vm439 = vcmask 203776
        %v440 = vsel %vm439, %v431, %v437
        %441 = vrot.lane.b32.xlu0 %v317, 120
        %v442 = vpop.permute.xlu0 %441
        %443 = vrot.lane.b32.xlu0 %v331, 120
        %v444 = vpop.permute.xlu0 %443
        %445 = vrot.lane.b32.xlu0 %v328, 120
        %v446 = vpop.permute.xlu0 %445
        %vm447 = vcmask 982016
        %v448 = vsel %vm447, %v442, %v444
        %v449 = vsel %vm447, %v444, %v446
        %453 = vrot.lane.b32.xlu0 %v317, 24
        %v454 = vpop.permute.xlu0 %453
        %vm456 = vcmask 195584
        %v457 = vsel %vm456, %v446, %v454
        %458 = vrot.lane.b32.xlu0 %v317, 119
        %v459 = vpop.permute.xlu0 %458
        %460 = vrot.lane.b32.xlu0 %v331, 119
        %v461 = vpop.permute.xlu0 %460
        %462 = vrot.lane.b32.xlu0 %v328, 119
        %v463 = vpop.permute.xlu0 %462
        %vm464 = vcmask 973824
        %v465 = vsel %vm464, %v459, %v461
        %v466 = vsel %vm464, %v461, %v463
        %468 = vrot.lane.b32.xlu0 %v317, 23
        %v469 = vpop.permute.xlu0 %468
        %vm471 = vcmask 187392
        %v472 = vsel %vm471, %v463, %v469
        %473 = vrot.lane.b32.xlu0 %v317, 118
        %v474 = vpop.permute.xlu0 %473
        %475 = vrot.lane.b32.xlu0 %v331, 118
        %v476 = vpop.permute.xlu0 %475
        %477 = vrot.lane.b32.xlu0 %v328, 118
        %v478 = vpop.permute.xlu0 %477
        %vm479 = vcmask 965632
        %v480 = vsel %vm479, %v474, %v476
        %v481 = vsel %vm479, %v476, %v478
        %483 = vrot.lane.b32.xlu0 %v317, 22
        %v484 = vpop.permute.xlu0 %483
        %vm486 = vcmask 179200
        %v487 = vsel %vm486, %v478, %v484
        %488 = vrot.lane.b32.xlu0 %v317, 117
        %v489 = vpop.permute.xlu0 %488
        %490 = vrot.lane.b32.xlu0 %v331, 117
        %v491 = vpop.permute.xlu0 %490
        %492 = vrot.lane.b32.xlu0 %v328, 117
        %v493 = vpop.permute.xlu0 %492
        %vm494 = vcmask 957440
        %v495 = vsel %vm494, %v489, %v491
        %v496 = vsel %vm494, %v491, %v493
        %498 = vrot.lane.b32.xlu0 %v317, 21
        %v499 = vpop.permute.xlu0 %498
        %vm501 = vcmask 171008
        %v502 = vsel %vm501, %v493, %v499
        %503 = vrot.lane.b32.xlu0 %v317, 116
        %v504 = vpop.permute.xlu0 %503
        %505 = vrot.lane.b32.xlu0 %v331, 116
        %v506 = vpop.permute.xlu0 %505
        %507 = vrot.lane.b32.xlu0 %v328, 116
        %v508 = vpop.permute.xlu0 %507
        %vm509 = vcmask 949248
        %v510 = vsel %vm509, %v504, %v506
        %v511 = vsel %vm509, %v506, %v508
        %515 = vrot.lane.b32.xlu0 %v317, 20
        %v516 = vpop.permute.xlu0 %515
        %vm518 = vcmask 162816
        %v519 = vsel %vm518, %v508, %v516
        %520 = vrot.lane.b32.xlu0 %v317, 115
        %v521 = vpop.permute.xlu0 %520
        %522 = vrot.lane.b32.xlu0 %v331, 115
        %v523 = vpop.permute.xlu0 %522
        %524 = vrot.lane.b32.xlu0 %v328, 115
        %v525 = vpop.permute.xlu0 %524
        %vm526 = vcmask 941056
        %v527 = vsel %vm526, %v521, %v523
        %v528 = vsel %vm526, %v523, %v525
        %530 = vrot.lane.b32.xlu0 %v317, 19
        %v531 = vpop.permute.xlu0 %530
        %vm533 = vcmask 154624
        %v534 = vsel %vm533, %v525, %v531
        %535 = vrot.lane.b32.xlu0 %v317, 114
        %v536 = vpop.permute.xlu0 %535
        %537 = vrot.lane.b32.xlu0 %v331, 114
        %v538 = vpop.permute.xlu0 %537
        %539 = vrot.lane.b32.xlu0 %v328, 114
        %v540 = vpop.permute.xlu0 %539
        %vm541 = vcmask 932864
        %v542 = vsel %vm541, %v536, %v538
        %v543 = vsel %vm541, %v538, %v540
        %545 = vrot.lane.b32.xlu0 %v317, 18
        %v546 = vpop.permute.xlu0 %545
        %vm548 = vcmask 146432
        %v549 = vsel %vm548, %v540, %v546
        %550 = vrot.lane.b32.xlu0 %v317, 113
        %v551 = vpop.permute.xlu0 %550
        %552 = vrot.lane.b32.xlu0 %v331, 113
        %v553 = vpop.permute.xlu0 %552
        %554 = vrot.lane.b32.xlu0 %v328, 113
        %v555 = vpop.permute.xlu0 %554
        %vm556 = vcmask 924672
        %v557 = vsel %vm556, %v551, %v553
        %v558 = vsel %vm556, %v553, %v555
        %560 = vrot.lane.b32.xlu0 %v317, 17
        %v561 = vpop.permute.xlu0 %560
        %vm563 = vcmask 138240
        %v564 = vsel %vm563, %v555, %v561
        %565 = vrot.lane.b32.xlu0 %v317, 112
        %v566 = vpop.permute.xlu0 %565
        %567 = vrot.lane.b32.xlu0 %v331, 112
        %v568 = vpop.permute.xlu0 %567
        %569 = vrot.lane.b32.xlu0 %v328, 112
        %v570 = vpop.permute.xlu0 %569
        %vm571 = vcmask 916480
        %v572 = vsel %vm571, %v566, %v568
        %v573 = vsel %vm571, %v568, %v570
        %577 = vrot.lane.b32.xlu0 %v317, 16
        %v578 = vpop.permute.xlu0 %577
        %v580 = vsel %vm327, %v570, %v578
        %581 = vrot.lane.b32.xlu0 %v317, 111
        %v582 = vpop.permute.xlu0 %581
        %583 = vrot.lane.b32.xlu0 %v331, 111
        %v584 = vpop.permute.xlu0 %583
        %585 = vrot.lane.b32.xlu0 %v328, 111
        %v586 = vpop.permute.xlu0 %585
        %vm587 = vcmask 908288
        %v588 = vsel %vm587, %v582, %v584
        %v589 = vsel %vm587, %v584, %v586
        %591 = vrot.lane.b32.xlu0 %v317, 15
        %v592 = vpop.permute.xlu0 %591
        %vm594 = vcmask 121856
        %v595 = vsel %vm594, %v586, %v592
        %596 = vrot.lane.b32.xlu0 %v317, 110
        %v597 = vpop.permute.xlu0 %596
        %598 = vrot.lane.b32.xlu0 %v331, 110
        %v599 = vpop.permute.xlu0 %598
        %600 = vrot.lane.b32.xlu0 %v328, 110
        %v601 = vpop.permute.xlu0 %600
        %vm602 = vcmask 900096
        %v603 = vsel %vm602, %v597, %v599
        %v604 = vsel %vm602, %v599, %v601
        %606 = vrot.lane.b32.xlu0 %v317, 14
        %v607 = vpop.permute.xlu0 %606
        %vm609 = vcmask 113664
        %v610 = vsel %vm609, %v601, %v607
        %611 = vrot.lane.b32.xlu0 %v317, 109
        %v612 = vpop.permute.xlu0 %611
        %613 = vrot.lane.b32.xlu0 %v331, 109
        %v614 = vpop.permute.xlu0 %613
        %615 = vrot.lane.b32.xlu0 %v328, 109
        %v616 = vpop.permute.xlu0 %615
        %vm617 = vcmask 891904
        %v618 = vsel %vm617, %v612, %v614
        %v619 = vsel %vm617, %v614, %v616
        %621 = vrot.lane.b32.xlu0 %v317, 13
        %v622 = vpop.permute.xlu0 %621
        %vm624 = vcmask 105472
        %v625 = vsel %vm624, %v616, %v622
        %626 = vrot.lane.b32.xlu0 %v317, 108
        %v627 = vpop.permute.xlu0 %626
        %628 = vrot.lane.b32.xlu0 %v331, 108
        %v629 = vpop.permute.xlu0 %628
        %630 = vrot.lane.b32.xlu0 %v328, 108
        %v631 = vpop.permute.xlu0 %630
        %vm632 = vcmask 883712
        %v633 = vsel %vm632, %v627, %v629
        %v634 = vsel %vm632, %v629, %v631
        %638 = vrot.lane.b32.xlu0 %v317, 12
        %v639 = vpop.permute.xlu0 %638
        %vm641 = vcmask 97280
        %v642 = vsel %vm641, %v631, %v639
        %643 = vrot.lane.b32.xlu0 %v317, 107
        %v644 = vpop.permute.xlu0 %643
        %645 = vrot.lane.b32.xlu0 %v331, 107
        %v646 = vpop.permute.xlu0 %645
        %647 = vrot.lane.b32.xlu0 %v328, 107
        %v648 = vpop.permute.xlu0 %647
        %vm649 = vcmask 875520
        %v650 = vsel %vm649, %v644, %v646
        %v651 = vsel %vm649, %v646, %v648
        %653 = vrot.lane.b32.xlu0 %v317, 11
        %v654 = vpop.permute.xlu0 %653
        %vm656 = vcmask 89088
        %v657 = vsel %vm656, %v648, %v654
        %658 = vrot.lane.b32.xlu0 %v317, 106
        %v659 = vpop.permute.xlu0 %658
        %660 = vrot.lane.b32.xlu0 %v331, 106
        %v661 = vpop.permute.xlu0 %660
        %662 = vrot.lane.b32.xlu0 %v328, 106
        %v663 = vpop.permute.xlu0 %662
        %vm664 = vcmask 867328
        %v665 = vsel %vm664, %v659, %v661
        %v666 = vsel %vm664, %v661, %v663
        %668 = vrot.lane.b32.xlu0 %v317, 10
        %v669 = vpop.permute.xlu0 %668
        %vm671 = vcmask 80896
        %v672 = vsel %vm671, %v663, %v669
        %673 = vrot.lane.b32.xlu0 %v317, 105
        %v674 = vpop.permute.xlu0 %673
        %675 = vrot.lane.b32.xlu0 %v331, 105
        %v676 = vpop.permute.xlu0 %675
        %677 = vrot.lane.b32.xlu0 %v328, 105
        %v678 = vpop.permute.xlu0 %677
        %vm679 = vcmask 859136
        %v680 = vsel %vm679, %v674, %v676
        %v681 = vsel %vm679, %v676, %v678
        %683 = vrot.lane.b32.xlu0 %v317, 9
        %v684 = vpop.permute.xlu0 %683
        %vm686 = vcmask 72704
        %v687 = vsel %vm686, %v678, %v684
        %688 = vrot.lane.b32.xlu0 %v317, 104
        %v689 = vpop.permute.xlu0 %688
        %690 = vrot.lane.b32.xlu0 %v331, 104
        %v691 = vpop.permute.xlu0 %690
        %692 = vrot.lane.b32.xlu0 %v328, 104
        %v693 = vpop.permute.xlu0 %692
        %vm694 = vcmask 850944
        %v695 = vsel %vm694, %v689, %v691
        %v696 = vsel %vm694, %v691, %v693
        %698 = vrot.lane.b32.xlu0 %v317, 8
        %v699 = vpop.permute.xlu0 %698
        %vm701 = vcmask 64512
        %v702 = vsel %vm701, %v693, %v699
        %v704 = vrot.slane %v341, 2
        %v705 = vrot.slane %v342, 2
        %v706 = vrot.slane %v348, 2
        %v711 = vrot.slane %v356, 4
        %v712 = vrot.slane %v357, 4
        %v713 = vrot.slane %v363, 4
        %v718 = vrot.slane %v371, 6
        %v719 = vrot.slane %v372, 6
        %v720 = vrot.slane %v378, 6
        %v725 = vrot.slane %v403, 2
        %v726 = vrot.slane %v404, 2
        %v727 = vrot.slane %v410, 2
        %v732 = vrot.slane %v418, 4
        %v733 = vrot.slane %v419, 4
        %v734 = vrot.slane %v425, 4
        %v739 = vrot.slane %v433, 6
        %v740 = vrot.slane %v434, 6
        %v741 = vrot.slane %v440, 6
        %v746 = vrot.slane %v465, 2
        %v747 = vrot.slane %v466, 2
        %v748 = vrot.slane %v472, 2
        %v753 = vrot.slane %v480, 4
        %v754 = vrot.slane %v481, 4
        %v755 = vrot.slane %v487, 4
        %v760 = vrot.slane %v495, 6
        %v761 = vrot.slane %v496, 6
        %v762 = vrot.slane %v502, 6
        %v767 = vrot.slane %v527, 2
        %v768 = vrot.slane %v528, 2
        %v769 = vrot.slane %v534, 2
        %v774 = vrot.slane %v542, 4
        %v775 = vrot.slane %v543, 4
        %v776 = vrot.slane %v549, 4
        %v781 = vrot.slane %v557, 6
        %v782 = vrot.slane %v558, 6
        %v783 = vrot.slane %v564, 6
        %vm787 = vcmask 1045504
        %v788 = vsel %vm787, %v317, %v704
        %v789 = vsel %vm787, %v331, %v705
        %v790 = vsel %vm787, %v328, %v706
        %vm791 = vcmask 1043456
        %v792 = vsel %vm791, %v704, %v711
        %v793 = vsel %vm791, %v705, %v712
        %v794 = vsel %vm791, %v706, %v713
        %vm795 = vcmask 1041408
        %v796 = vsel %vm795, %v711, %v718
        %v797 = vsel %vm795, %v712, %v719
        %v798 = vsel %vm795, %v713, %v720
        %v799 = vsel %vm787, %v386, %v725
        %v800 = vsel %vm787, %v387, %v726
        %v801 = vsel %vm787, %v395, %v727
        %v802 = vsel %vm791, %v725, %v732
        %v803 = vsel %vm791, %v726, %v733
        %v804 = vsel %vm791, %v727, %v734
        %v805 = vsel %vm795, %v732, %v739
        %v806 = vsel %vm795, %v733, %v740
        %v807 = vsel %vm795, %v734, %v741
        %v808 = vsel %vm787, %v448, %v746
        %v809 = vsel %vm787, %v449, %v747
        %v810 = vsel %vm787, %v457, %v748
        %v811 = vsel %vm791, %v746, %v753
        %v812 = vsel %vm791, %v747, %v754
        %v813 = vsel %vm791, %v748, %v755
        %v814 = vsel %vm795, %v753, %v760
        %v815 = vsel %vm795, %v754, %v761
        %v816 = vsel %vm795, %v755, %v762
        %v817 = vsel %vm787, %v510, %v767
        %v818 = vsel %vm787, %v511, %v768
        %v819 = vsel %vm787, %v519, %v769
        %v820 = vsel %vm791, %v767, %v774
        %v821 = vsel %vm791, %v768, %v775
        %v822 = vsel %vm791, %v769, %v776
        %v823 = vsel %vm795, %v774, %v781
        %v824 = vsel %vm795, %v775, %v782
        %v825 = vsel %vm795, %v776, %v783
        %v827 = vrot.slane %v588, 2
        %v828 = vrot.slane %v589, 2
        %v829 = vrot.slane %v595, 2
        %v834 = vrot.slane %v603, 4
        %v835 = vrot.slane %v604, 4
        %v836 = vrot.slane %v610, 4
        %v841 = vrot.slane %v618, 6
        %v842 = vrot.slane %v619, 6
        %v843 = vrot.slane %v625, 6
        %v848 = vrot.slane %v650, 2
        %v849 = vrot.slane %v651, 2
        %v850 = vrot.slane %v657, 2
        %v855 = vrot.slane %v665, 4
        %v856 = vrot.slane %v666, 4
        %v857 = vrot.slane %v672, 4
        %v862 = vrot.slane %v680, 6
        %v863 = vrot.slane %v681, 6
        %v864 = vrot.slane %v687, 6
        %v868 = vsel %vm787, %v572, %v827
        %v869 = vsel %vm787, %v573, %v828
        %v870 = vsel %vm787, %v580, %v829
        %v871 = vsel %vm791, %v827, %v834
        %v872 = vsel %vm791, %v828, %v835
        %v873 = vsel %vm791, %v829, %v836
        %v874 = vsel %vm795, %v834, %v841
        %v875 = vsel %vm795, %v835, %v842
        %v876 = vsel %vm795, %v836, %v843
        %v877 = vsel %vm787, %v633, %v848
        %v878 = vsel %vm787, %v634, %v849
        %v879 = vsel %vm787, %v642, %v850
        %v880 = vsel %vm791, %v848, %v855
        %v881 = vsel %vm791, %v849, %v856
        %v882 = vsel %vm791, %v850, %v857
        %v883 = vsel %vm795, %v855, %v862
        %v884 = vsel %vm795, %v856, %v863
        %v885 = vsel %vm795, %v857, %v864
        %887 = vset.pattern.permute.xlu0 0
        %888 = vperm.xlu0 %887, %v266
        %v889 = vpop.permute.xlu0 %888
        %892 = vset.pattern.permute.xlu0 0
        %893 = vperm.xlu0 %892, %v267
        %v894 = vpop.permute.xlu0 %893
        %897 = vset.pattern.permute.xlu0 0
        %898 = vperm.xlu0 %897, %v268
        %v899 = vpop.permute.xlu0 %898
        %902 = vset.pattern.permute.xlu0 0
        %903 = vperm.xlu0 %902, %v269
        %v904 = vpop.permute.xlu0 %903
        %907 = vset.pattern.permute.xlu0 0
        %908 = vperm.xlu0 %907, %v270
        %v909 = vpop.permute.xlu0 %908
        %v912 = vsel %vm486, %v257, 0
        %v915 = vsel %vm486, %v259, 0
        %v918 = vsel %vm486, %v261, 0
        %v921 = vsel %vm486, %v263, 0
        %v924 = vsel %vm486, %v265, 0
        %v926 = vsel %vm787, %v695, 0
        %v928 = vsel %vm787, %v696, 0
        %v931 = vsel %vm787, %v702, 0
        %933 = vmatpush.msra.mxu0 %v877
        %934 = vmatpush.msra.mxu0 %v874
        %935 = vmatpush.msra.mxu0 %v871
        %936 = vmatpush.msra.mxu0 %v868
        %937 = vmatpush.msra.mxu0 %v823
        %938 = vmatpush.msra.mxu0 %v820
        %939 = vmatpush.msra.mxu0 %v817
        %940 = vmatpush.msra.mxu0 %v814
        %941 = vmatpush.msra.mxu0 %v811
        %942 = vmatpush.msra.mxu0 %v808
        %943 = vmatpush.msra.mxu0 %v805
        %944 = vmatpush.msra.mxu0 %v802
        %945 = vmatpush.msra.mxu0 %v799
        %946 = vmatpush.msra.mxu0 %v796
        %947 = vmatpush.msra.mxu0 %v792
        %948 = vmatpush.msra.mxu0 %v788
        %949 = vmatmul.f32.gmra.mxu0 %v256
        %v950 = vpop.f32.mrf.mxu0
        %v951 = vadd.f32 %v889, %v950
        %952 = vmatmul.f32.gmra.mxu0 %v258
        %v953 = vpop.f32.mrf.mxu0
        %v954 = vadd.f32 %v894, %v953
        %955 = vmatmul.f32.gmra.mxu0 %v260
        %v956 = vpop.f32.mrf.mxu0
        %v957 = vadd.f32 %v899, %v956
        %958 = vmatmul.f32.gmra.mxu0 %v262
        %v959 = vpop.f32.mrf.mxu0
        %v960 = vadd.f32 %v904, %v959
        %961 = vmatmul.f32.gmra.mxu0 %v264
        %v962 = vpop.f32.mrf.mxu0
        %v963 = vadd.f32 %v909, %v962
        %964 = vdwg.mxu0
        %965 = vmatpush.msra.mxu0 0.0
        %966 = vmatpush.msra.mxu0 0.0
        %967 = vmatpush.msra.mxu0 0.0
        %968 = vmatpush.msra.mxu0 0.0
        %969 = vmatpush.msra.mxu0 0.0
        %970 = vmatpush.msra.mxu0 0.0
        %971 = vmatpush.msra.mxu0 0.0
        %972 = vmatpush.msra.mxu0 0.0
        %973 = vmatpush.msra.mxu0 0.0
        %974 = vmatpush.msra.mxu0 0.0
        %975 = vmatpush.msra.mxu0 0.0
        %976 = vmatpush.msra.mxu0 0.0
        %977 = vmatpush.msra.mxu0 0.0
        %978 = vmatpush.msra.mxu0 %v926
        %979 = vmatpush.msra.mxu0 %v883
        %980 = vmatpush.msra.mxu0 %v880
        %981 = vmatmul.f32.gmra.mxu0 %v912
        %v982 = vpop.f32.mrf.mxu0
        %v983 = vadd.f32 %v951, %v982
        %984 = vmatmul.f32.gmra.mxu0 %v915
        %v985 = vpop.f32.mrf.mxu0
        %v986 = vadd.f32 %v954, %v985
        %987 = vmatmul.f32.gmra.mxu0 %v918
        %v988 = vpop.f32.mrf.mxu0
        %v989 = vadd.f32 %v957, %v988
        %990 = vmatmul.f32.gmra.mxu0 %v921
        %v991 = vpop.f32.mrf.mxu0
        %v992 = vadd.f32 %v960, %v991
        %993 = vmatmul.f32.gmra.mxu0 %v924
        %v994 = vpop.f32.mrf.mxu0
        %v995 = vadd.f32 %v963, %v994
        %996 = vdwg.mxu0
        %997 = vmatpush.msra.mxu0 %v878
        %998 = vmatpush.msra.mxu0 %v875
        %999 = vmatpush.msra.mxu0 %v872
        %1000 = vmatpush.msra.mxu0 %v869
        %1001 = vmatpush.msra.mxu0 %v824
        %1002 = vmatpush.msra.mxu0 %v821
        %1003 = vmatpush.msra.mxu0 %v818
        %1004 = vmatpush.msra.mxu0 %v815
        %1005 = vmatpush.msra.mxu0 %v812
        %1006 = vmatpush.msra.mxu0 %v809
        %1007 = vmatpush.msra.mxu0 %v806
        %1008 = vmatpush.msra.mxu0 %v803
        %1009 = vmatpush.msra.mxu0 %v800
        %1010 = vmatpush.msra.mxu0 %v797
        %1011 = vmatpush.msra.mxu0 %v793
        %1012 = vmatpush.msra.mxu0 %v789
        %1013 = vmatmul.f32.gmra.mxu0 %v256
        %v1014 = vpop.f32.mrf.mxu0
        %v1015 = vadd.f32 %v889, %v1014
        %1016 = vmatmul.f32.gmra.mxu0 %v258
        %v1017 = vpop.f32.mrf.mxu0
        %v1018 = vadd.f32 %v894, %v1017
        %1019 = vmatmul.f32.gmra.mxu0 %v260
        %v1020 = vpop.f32.mrf.mxu0
        %v1021 = vadd.f32 %v899, %v1020
        %1022 = vmatmul.f32.gmra.mxu0 %v262
        %v1023 = vpop.f32.mrf.mxu0
        %v1024 = vadd.f32 %v904, %v1023
        %1025 = vmatmul.f32.gmra.mxu0 %v264
        %v1026 = vpop.f32.mrf.mxu0
        %v1027 = vadd.f32 %v909, %v1026
        %1028 = vdwg.mxu0
        %1029 = vmatpush.msra.mxu0 0.0
        %1030 = vmatpush.msra.mxu0 0.0
        %1031 = vmatpush.msra.mxu0 0.0
        %1032 = vmatpush.msra.mxu0 0.0
        %1033 = vmatpush.msra.mxu0 0.0
        %1034 = vmatpush.msra.mxu0 0.0
        %1035 = vmatpush.msra.mxu0 0.0
        %1036 = vmatpush.msra.mxu0 0.0
        %1037 = vmatpush.msra.mxu0 0.0
        %1038 = vmatpush.msra.mxu0 0.0
        %1039 = vmatpush.msra.mxu0 0.0
        %1040 = vmatpush.msra.mxu0 0.0
        %1041 = vmatpush.msra.mxu0 0.0
        %1042 = vmatpush.msra.mxu0 %v928
        %1043 = vmatpush.msra.mxu0 %v884
        %1044 = vmatpush.msra.mxu0 %v881
        %1045 = vmatmul.f32.gmra.mxu0 %v912
        %v1046 = vpop.f32.mrf.mxu0
        %v1047 = vadd.f32 %v1015, %v1046
        %1048 = vmatmul.f32.gmra.mxu0 %v915
        %v1049 = vpop.f32.mrf.mxu0
        %v1050 = vadd.f32 %v1018, %v1049
        %1051 = vmatmul.f32.gmra.mxu0 %v918
        %v1052 = vpop.f32.mrf.mxu0
        %v1053 = vadd.f32 %v1021, %v1052
        %1054 = vmatmul.f32.gmra.mxu0 %v921
        %v1055 = vpop.f32.mrf.mxu0
        %v1056 = vadd.f32 %v1024, %v1055
        %1057 = vmatmul.f32.gmra.mxu0 %v924
        %v1058 = vpop.f32.mrf.mxu0
        %v1059 = vadd.f32 %v1027, %v1058
        %1060 = vdwg.mxu0
        %1061 = vmatpush.msra.mxu0 %v879
        %1062 = vmatpush.msra.mxu0 %v876
        %1063 = vmatpush.msra.mxu0 %v873
        %1064 = vmatpush.msra.mxu0 %v870
        %1065 = vmatpush.msra.mxu0 %v825
        %1066 = vmatpush.msra.mxu0 %v822
        %1067 = vmatpush.msra.mxu0 %v819
        %1068 = vmatpush.msra.mxu0 %v816
        %1069 = vmatpush.msra.mxu0 %v813
        %1070 = vmatpush.msra.mxu0 %v810
        %1071 = vmatpush.msra.mxu0 %v807
        %1072 = vmatpush.msra.mxu0 %v804
        %1073 = vmatpush.msra.mxu0 %v801
        %1074 = vmatpush.msra.mxu0 %v798
        %1075 = vmatpush.msra.mxu0 %v794
        %1076 = vmatpush.msra.mxu0 %v790
        %1077 = vmatmul.f32.gmra.mxu0 %v256
        %v1078 = vpop.f32.mrf.mxu0
        %v1079 = vadd.f32 %v889, %v1078
        %1080 = vmatmul.f32.gmra.mxu0 %v258
        %v1081 = vpop.f32.mrf.mxu0
        %v1082 = vadd.f32 %v894, %v1081
        %1083 = vmatmul.f32.gmra.mxu0 %v260
        %v1084 = vpop.f32.mrf.mxu0
        %v1085 = vadd.f32 %v899, %v1084
        %1086 = vmatmul.f32.gmra.mxu0 %v262
        %v1087 = vpop.f32.mrf.mxu0
        %v1088 = vadd.f32 %v904, %v1087
        %1089 = vmatmul.f32.gmra.mxu0 %v264
        %v1090 = vpop.f32.mrf.mxu0
        %v1091 = vadd.f32 %v909, %v1090
        %1092 = vdwg.mxu0
        %1093 = vmatpush.msra.mxu0 0.0
        %1094 = vmatpush.msra.mxu0 0.0
        %1095 = vmatpush.msra.mxu0 0.0
        %1096 = vmatpush.msra.mxu0 0.0
        %1097 = vmatpush.msra.mxu0 0.0
        %1098 = vmatpush.msra.mxu0 0.0
        %1099 = vmatpush.msra.mxu0 0.0
        %1100 = vmatpush.msra.mxu0 0.0
        %1101 = vmatpush.msra.mxu0 0.0
        %1102 = vmatpush.msra.mxu0 0.0
        %1103 = vmatpush.msra.mxu0 0.0
        %1104 = vmatpush.msra.mxu0 0.0
        %1105 = vmatpush.msra.mxu0 0.0
        %1106 = vmatpush.msra.mxu0 %v931
        %1107 = vmatpush.msra.mxu0 %v885
        %1108 = vmatpush.msra.mxu0 %v882
        %1109 = vmatmul.f32.gmra.mxu0 %v912
        %v1110 = vpop.f32.mrf.mxu0
        %v1111 = vadd.f32 %v1079, %v1110
        %1112 = vmatmul.f32.gmra.mxu0 %v915
        %v1113 = vpop.f32.mrf.mxu0
        %v1114 = vadd.f32 %v1082, %v1113
        %1115 = vmatmul.f32.gmra.mxu0 %v918
        %v1116 = vpop.f32.mrf.mxu0
        %v1117 = vadd.f32 %v1085, %v1116
        %1118 = vmatmul.f32.gmra.mxu0 %v921
        %v1119 = vpop.f32.mrf.mxu0
        %v1120 = vadd.f32 %v1088, %v1119
        %1121 = vmatmul.f32.gmra.mxu0 %v924
        %v1122 = vpop.f32.mrf.mxu0
        %v1123 = vadd.f32 %v1091, %v1122
        %1124 = vdwg.mxu0
        %vm1125 = vcmp.gt.f32.partialorder %v983, 0.0
        %vm1126 = vcmp.gt.f32.partialorder %v1047, 0.0
        %vm1127 = vcmp.gt.f32.partialorder %v1111, 0.0
        %vm1128 = vcmp.gt.f32.partialorder %v986, 0.0
        %vm1129 = vcmp.gt.f32.partialorder %v1050, 0.0
        %vm1130 = vcmp.gt.f32.partialorder %v1114, 0.0
        %vm1131 = vcmp.gt.f32.partialorder %v989, 0.0
        %vm1132 = vcmp.gt.f32.partialorder %v1053, 0.0
        %vm1133 = vcmp.gt.f32.partialorder %v1117, 0.0
        %vm1134 = vcmp.gt.f32.partialorder %v992, 0.0
        %vm1135 = vcmp.gt.f32.partialorder %v1056, 0.0
        %vm1136 = vcmp.gt.f32.partialorder %v1120, 0.0
        %vm1137 = vcmp.gt.f32.partialorder %v995, 0.0
        %vm1138 = vcmp.gt.f32.partialorder %v1059, 0.0
        %vm1139 = vcmp.gt.f32.partialorder %v1123, 0.0
        %v1140 = vmin.f32 %v983, 0.0
        %v1141 = vmin.f32 %v1047, 0.0
        %v1142 = vmin.f32 %v1111, 0.0
        %v1143 = vmin.f32 %v986, 0.0
        %v1144 = vmin.f32 %v1050, 0.0
        %v1145 = vmin.f32 %v1114, 0.0
        %v1146 = vmin.f32 %v989, 0.0
        %v1147 = vmin.f32 %v1053, 0.0
        %v1148 = vmin.f32 %v1117, 0.0
        %v1149 = vmin.f32 %v992, 0.0
        %v1150 = vmin.f32 %v1056, 0.0
        %v1151 = vmin.f32 %v1120, 0.0
        %v1152 = vmin.f32 %v995, 0.0
        %v1153 = vmin.f32 %v1059, 0.0
        %v1154 = vmin.f32 %v1123, 0.0
        %v1155 = vmul.f32 %v1140, 1.442695
        %v1156 = vpow.pop %v1155
        %v1157 = vmul.f32 %v1141, 1.442695
        %v1158 = vpow.pop %v1157
        %v1159 = vmul.f32 %v1142, 1.442695
        %v1160 = vpow.pop %v1159
        %v1161 = vmul.f32 %v1143, 1.442695
        %v1162 = vpow.pop %v1161
        %v1163 = vmul.f32 %v1144, 1.442695
        %v1164 = vpow.pop %v1163
        %v1165 = vmul.f32 %v1145, 1.442695
        %v1166 = vpow.pop %v1165
        %v1167 = vmul.f32 %v1146, 1.442695
        %v1168 = vpow.pop %v1167
        %v1169 = vmul.f32 %v1147, 1.442695
        %v1170 = vpow.pop %v1169
        %v1171 = vmul.f32 %v1148, 1.442695
        %v1172 = vpow.pop %v1171
        %v1173 = vmul.f32 %v1149, 1.442695
        %v1174 = vpow.pop %v1173
        %v1175 = vmul.f32 %v1150, 1.442695
        %v1176 = vpow.pop %v1175
        %v1177 = vmul.f32 %v1151, 1.442695
        %v1178 = vpow.pop %v1177
        %v1179 = vmul.f32 %v1152, 1.442695
        %v1180 = vpow.pop %v1179
        %v1181 = vmul.f32 %v1153, 1.442695
        %v1182 = vpow.pop %v1181
        %v1183 = vmul.f32 %v1154, 1.442695
        %v1184 = vpow.pop %v1183
        %v1185 = vsub.f32 %v1156, 1.0
        %v1186 = vsub.f32 %v1158, 1.0
        %v1187 = vsub.f32 %v1160, 1.0
        %v1188 = vsub.f32 %v1162, 1.0
        %v1189 = vsub.f32 %v1164, 1.0
        %v1190 = vsub.f32 %v1166, 1.0
        %v1191 = vsub.f32 %v1168, 1.0
        %v1192 = vsub.f32 %v1170, 1.0
        %v1193 = vsub.f32 %v1172, 1.0
        %v1194 = vsub.f32 %v1174, 1.0
        %v1195 = vsub.f32 %v1176, 1.0
        %v1196 = vsub.f32 %v1178, 1.0
        %v1197 = vsub.f32 %v1180, 1.0
        %v1198 = vsub.f32 %v1182, 1.0
        %v1199 = vsub.f32 %v1184, 1.0
        %v1200 = vsel %vm1125, %v983, %v1185
        %v1201 = vsel %vm1126, %v1047, %v1186
        %v1202 = vsel %vm1127, %v1111, %v1187
        %v1203 = vsel %vm1128, %v986, %v1188
        %v1204 = vsel %vm1129, %v1050, %v1189
        %v1205 = vsel %vm1130, %v1114, %v1190
        %v1206 = vsel %vm1131, %v989, %v1191
        %v1207 = vsel %vm1132, %v1053, %v1192
        %v1208 = vsel %vm1133, %v1117, %v1193
        %v1209 = vsel %vm1134, %v992, %v1194
        %v1210 = vsel %vm1135, %v1056, %v1195
        %v1211 = vsel %vm1136, %v1120, %v1196
        %v1212 = vsel %vm1137, %v995, %v1197
        %v1213 = vsel %vm1138, %v1059, %v1198
        %v1214 = vsel %vm1139, %v1123, %v1199
        %vm1215 = vcmask 261120
        %v1217 = vsel %vm1215, %v1202, 0
        %v1220 = vsel %vm1215, %v1205, 0
        %v1223 = vsel %vm1215, %v1208, 0
        %v1226 = vsel %vm1215, %v1211, 0
        %v1229 = vsel %vm1215, %v1214, 0
        %1231 = vmatpush.msra.mxu0 %v286
        %1232 = vmatpush.msra.mxu0 %v285
        %1233 = vmatpush.msra.mxu0 %v284
        %1234 = vmatpush.msra.mxu0 %v283
        %1235 = vmatpush.msra.mxu0 %v282
        %1236 = vmatpush.msra.mxu0 %v281
        %1237 = vmatpush.msra.mxu0 %v280
        %1238 = vmatpush.msra.mxu0 %v279
        %1239 = vmatpush.msra.mxu0 %v278
        %1240 = vmatpush.msra.mxu0 %v277
        %1241 = vmatpush.msra.mxu0 %v276
        %1242 = vmatpush.msra.mxu0 %v275
        %1243 = vmatpush.msra.mxu0 %v274
        %1244 = vmatpush.msra.mxu0 %v273
        %1245 = vmatpush.msra.mxu0 %v272
        %1246 = vmatpush.msra.mxu0 %v271
        %1247 = vmatmul.f32.gmra.mxu0 %v1200
        %v1248 = vpop.f32.mrf.mxu0
        %v1249 = vadd.f32 0.0, %v1248
        %1250 = vmatmul.f32.gmra.mxu0 %v1203
        %v1251 = vpop.f32.mrf.mxu0
        %v1252 = vadd.f32 0.0, %v1251
        %1253 = vmatmul.f32.gmra.mxu0 %v1206
        %v1254 = vpop.f32.mrf.mxu0
        %v1255 = vadd.f32 0.0, %v1254
        %1256 = vmatmul.f32.gmra.mxu0 %v1209
        %v1257 = vpop.f32.mrf.mxu0
        %v1258 = vadd.f32 0.0, %v1257
        %1259 = vmatmul.f32.gmra.mxu0 %v1212
        %v1260 = vpop.f32.mrf.mxu0
        %v1261 = vadd.f32 0.0, %v1260
        %1262 = vdwg.mxu0
        %1263 = vmatpush.msra.mxu0 %v302
        %1264 = vmatpush.msra.mxu0 %v301
        %1265 = vmatpush.msra.mxu0 %v300
        %1266 = vmatpush.msra.mxu0 %v299
        %1267 = vmatpush.msra.mxu0 %v298
        %1268 = vmatpush.msra.mxu0 %v297
        %1269 = vmatpush.msra.mxu0 %v296
        %1270 = vmatpush.msra.mxu0 %v295
        %1271 = vmatpush.msra.mxu0 %v294
        %1272 = vmatpush.msra.mxu0 %v293
        %1273 = vmatpush.msra.mxu0 %v292
        %1274 = vmatpush.msra.mxu0 %v291
        %1275 = vmatpush.msra.mxu0 %v290
        %1276 = vmatpush.msra.mxu0 %v289
        %1277 = vmatpush.msra.mxu0 %v288
        %1278 = vmatpush.msra.mxu0 %v287
        %1279 = vmatmul.f32.gmra.mxu0 %v1201
        %v1280 = vpop.f32.mrf.mxu0
        %v1281 = vadd.f32 %v1249, %v1280
        %1282 = vmatmul.f32.gmra.mxu0 %v1204
        %v1283 = vpop.f32.mrf.mxu0
        %v1284 = vadd.f32 %v1252, %v1283
        %1285 = vmatmul.f32.gmra.mxu0 %v1207
        %v1286 = vpop.f32.mrf.mxu0
        %v1287 = vadd.f32 %v1255, %v1286
        %1288 = vmatmul.f32.gmra.mxu0 %v1210
        %v1289 = vpop.f32.mrf.mxu0
        %v1290 = vadd.f32 %v1258, %v1289
        %1291 = vmatmul.f32.gmra.mxu0 %v1213
        %v1292 = vpop.f32.mrf.mxu0
        %v1293 = vadd.f32 %v1261, %v1292
        %1294 = vdwg.mxu0
        %1295 = vmatpush.msra.mxu0 0.0
        %1296 = vmatpush.msra.mxu0 0.0
        %1297 = vmatpush.msra.mxu0 0.0
        %1298 = vmatpush.msra.mxu0 0.0
        %1299 = vmatpush.msra.mxu0 0.0
        %1300 = vmatpush.msra.mxu0 0.0
        %1301 = vmatpush.msra.mxu0 0.0
        %1302 = vmatpush.msra.mxu0 0.0
        %1303 = vmatpush.msra.mxu0 0.0
        %1304 = vmatpush.msra.mxu0 0.0
        %1305 = vmatpush.msra.mxu0 0.0
        %1306 = vmatpush.msra.mxu0 0.0
        %1307 = vmatpush.msra.mxu0 %v306
        %1308 = vmatpush.msra.mxu0 %v305
        %1309 = vmatpush.msra.mxu0 %v304
        %1310 = vmatpush.msra.mxu0 %v303
        %1311 = vmatmul.f32.gmra.mxu0 %v1217
        %v1312 = vpop.f32.mrf.mxu0
        %v1313 = vadd.f32 %v1281, %v1312
        %1314 = vmatmul.f32.gmra.mxu0 %v1220
        %v1315 = vpop.f32.mrf.mxu0
        %v1316 = vadd.f32 %v1284, %v1315
        %1317 = vmatmul.f32.gmra.mxu0 %v1223
        %v1318 = vpop.f32.mrf.mxu0
        %v1319 = vadd.f32 %v1287, %v1318
        %1320 = vmatmul.f32.gmra.mxu0 %v1226
        %v1321 = vpop.f32.mrf.mxu0
        %v1322 = vadd.f32 %v1290, %v1321
        %1323 = vmatmul.f32.gmra.mxu0 %v1229
        %v1324 = vpop.f32.mrf.mxu0
        %v1325 = vadd.f32 %v1293, %v1324
        %1326 = vdwg.mxu0
        %1328 = vset.pattern.permute.xlu0 0
        %1329 = vperm.xlu0 %1328, %v312
        %v1330 = vpop.permute.xlu0 %1329
        %1333 = vset.pattern.permute.xlu0 0
        %1334 = vperm.xlu0 %1333, %v313
        %v1335 = vpop.permute.xlu0 %1334
        %1338 = vset.pattern.permute.xlu0 0
        %1339 = vperm.xlu0 %1338, %v314
        %v1340 = vpop.permute.xlu0 %1339
        %1343 = vset.pattern.permute.xlu0 0
        %1344 = vperm.xlu0 %1343, %v315
        %v1345 = vpop.permute.xlu0 %1344
        %1348 = vset.pattern.permute.xlu0 0
        %1349 = vperm.xlu0 %1348, %v316
        %v1350 = vpop.permute.xlu0 %1349
        %vm1352 = vcmask 326656
        %v1354 = vsel %vm1352, %v307, 0
        %v1357 = vsel %vm1352, %v308, 0
        %v1360 = vsel %vm1352, %v309, 0
        %v1363 = vsel %vm1352, %v310, 0
        %v1366 = vsel %vm1352, %v311, 0
        %1368 = vmatpush.msra.mxu0 0.0
        %1369 = vmatpush.msra.mxu0 0.0
        %1370 = vmatpush.msra.mxu0 0.0
        %1371 = vmatpush.msra.mxu0 0.0
        %1372 = vmatpush.msra.mxu0 0.0
        %1373 = vmatpush.msra.mxu0 0.0
        %1374 = vmatpush.msra.mxu0 0.0
        %1375 = vmatpush.msra.mxu0 0.0
        %1376 = vmatpush.msra.mxu0 0.0
        %1377 = vmatpush.msra.mxu0 0.0
        %1378 = vmatpush.msra.mxu0 0.0
        %1379 = vmatpush.msra.mxu0 %v1325
        %1380 = vmatpush.msra.mxu0 %v1322
        %1381 = vmatpush.msra.mxu0 %v1319
        %1382 = vmatpush.msra.mxu0 %v1316
        %1383 = vmatpush.msra.mxu0 %v1313
        %1384 = vmatmul.f32.gmra.mxu0 %v1354
        %v1385 = vpop.f32.mrf.mxu0
        %v1386 = vadd.f32 %v1330, %v1385
        %1387 = vmatmul.f32.gmra.mxu0 %v1357
        %v1388 = vpop.f32.mrf.mxu0
        %v1389 = vadd.f32 %v1335, %v1388
        %1390 = vmatmul.f32.gmra.mxu0 %v1360
        %v1391 = vpop.f32.mrf.mxu0
        %v1392 = vadd.f32 %v1340, %v1391
        %1393 = vmatmul.f32.gmra.mxu0 %v1363
        %v1394 = vpop.f32.mrf.mxu0
        %v1395 = vadd.f32 %v1345, %v1394
        %1396 = vmatmul.f32.gmra.mxu0 %v1366
        %v1397 = vpop.f32.mrf.mxu0
        %v1398 = vadd.f32 %v1350, %v1397
        %1399 = vdwg.mxu0
        %1400 = vxpose.xlu0.b32.start [1/16] %v1386, 128
        %1401 = vxpose.xlu0.b32.cont [2/16] %v1389, 128
        %1402 = vxpose.xlu0.b32.cont [3/16] %v1392, 128
        %1403 = vxpose.xlu0.b32.cont [4/16] %v1395, 128
        %1404 = vxpose.xlu0.b32.cont [5/16] %v1398, 128
        %1405 = vxpose.xlu0.b32.cont [6/16] 0.0, 128
        %1406 = vxpose.xlu0.b32.cont [7/16] 0.0, 128
        %1407 = vxpose.xlu0.b32.cont [8/16] 0.0, 128
        %1408 = vxpose.xlu0.b32.cont [9/16] 0.0, 128
        %1409 = vxpose.xlu0.b32.cont [10/16] 0.0, 128
        %1410 = vxpose.xlu0.b32.cont [11/16] 0.0, 128
        %1411 = vxpose.xlu0.b32.cont [12/16] 0.0, 128
        %1412 = vxpose.xlu0.b32.cont [13/16] 0.0, 128
        %1413 = vxpose.xlu0.b32.cont [14/16] 0.0, 128
        %1414 = vxpose.xlu0.b32.cont [15/16] 0.0, 128
        %1415 = vxpose.xlu0.b32.end [16/16] 0.0, 128
        %v1416 = vpop.trf.xlu0
        %v1417 = vpop.trf.xlu0
        %v1418 = vpop.trf.xlu0
        %v1419 = vpop.trf.xlu0
        %v1420 = vpop.trf.xlu0
        %v1421 = vpop.trf.xlu0
        %v1422 = vpop.trf.xlu0
        %v1423 = vpop.trf.xlu0
        %v1424 = vpop.trf.xlu0
        %v1425 = vpop.trf.xlu0
        %v1426 = vpop.trf.xlu0
        %v1427 = vpop.trf.xlu0
        %v1428 = vpop.trf.xlu0
        %v1429 = vpop.trf.xlu0
        %v1430 = vpop.trf.xlu0
        %v1431 = vpop.trf.xlu0
        %vm1432 = vcmask 322560
        %1433 = vst.msk [vmem:[%s247] sm:$0xf] %vm1432, %v1416
        %s1434 = scalar_lea.vmem %s247, 4 [#allocation2]
        %vm1435 = vcmask 326660
        %1436 = vst.msk [vmem:[%s1434 - $0x4] sm:$0xf0] %vm1435, %v1416
        %s1437 = sand.u32 %s159, 1
        %s1438 = scalar_lea.sflag [#allocation3], %s1437
        %s1439 = sand.u32 %s159, 1
        %s1440 = smul.addr %s1439, 8
        %s1441 = scalar_lea.vmem [#allocation2], %s1440
        // Predicated region
        $region45: #{tpu_custom_call.1} parent=43 // pred_check
          %p1442 = pneg %p169
        $region46: #{tpu_custom_call.1} parent=43 // pred_check_branch
          %1444 = sbr.rel (%p1442) target = $region48
        $region47: #{tpu_custom_call.1} parent=43 // pred_region
          %s1445 = smul.u32 2, %s20
          %1447 = vsyncadd %s1438, 0
          %s1448 = smul.addr %s1445, 4
          %s1449 = scalar_lea.hbm %s6, %s1448
          %s1450 = sshll.u32 %s1441, 4
          %s1451 = int_to_ptr.vmem [resolvable:$true] %s1450
          %s1452 = sshll.u32 %s1449, 4
          %s1453 = int_to_ptr.hbm [resolvable:$true] %s1452
          %1458 = dma.vmem_to_hbm [thread:$0]  %s1451, 128, %s1453, %s1438, 64, 64, 4
        $region48: #{tpu_custom_call.1} parent=43 // pred_fallthru
          _
      $region44: #{tpu_custom_call.1} parent=5 // pred_fallthru
        _
      %p1459 = scmp.le.s32.totalorder 2, %s15
      // Predicated region
      $region49: #{tpu_custom_call.1} parent=5 // pred_check
        %p1460 = pneg %p1459
      $region50: #{tpu_custom_call.1} parent=5 // pred_check_branch
        %1462 = sbr.rel (%p1460) target = $region52
      $region51: #{tpu_custom_call.1} parent=5 // pred_region
        %s1463 = ssub.s32 %s15, 2
        // Predicated region
        $region53: #{tpu_custom_call.1} parent=51 // pred_check
          %p1464 = pneg %p175
        $region54: #{tpu_custom_call.1} parent=51 // pred_check_branch
          %1466 = sbr.rel (%p1464) target = $region56
        $region55: #{tpu_custom_call.1} parent=51 // pred_region
          %s1467 = sand.u32 %s160, 1
          %s1468 = scalar_lea.sflag [#allocation3], %s1467
          %s1469 = sand.u32 %s160, 1
          %s1470 = smul.addr %s1469, 8
          %s1471 = scalar_lea.vmem [#allocation2], %s1470
          %1473 = dma.done %s1468, 128
        $region56: #{tpu_custom_call.1} parent=51 // pred_fallthru
          _
      $region52: #{tpu_custom_call.1} parent=5 // pred_fallthru
        _
    $region6: #{tpu_custom_call.1} parent=1 // loop_footer
      %s19 = sadd.s32 1, %s15
    $region7: #{tpu_custom_call.1} parent=1 // loop_footer_branch
      %14 = sbr.rel target = $region3
    $region8: #{tpu_custom_call.1} parent=1 // loop_exit
      _
    %1474 = vsyncpa [#allocation3], 1
    %s1475 = scalar_lea.sflag [#allocation3], 1
    %1476 = vsyncpa %s1475, 1

</llo_original>
